<compile_context>
chip_gen: v5e
topology: v5e:2x2
jax: 0.10.0
libtpu: 0.0.40
codegen_flags: <defaults>
</compile_context>

<pallas_src>
import jax
import jax.numpy as jnp
from jax.experimental import pallas as pl
from jax.experimental.pallas import tpu as pltpu


def _dist_head_kernel(x_ref, w_ref, b_ref, out_ref):
    """Linear head -> fused (loc | softplus(scale)) parameter tile."""
    two_q = out_ref.shape[-1]
    q_dim = two_q // 2

    # MXU matmul in full f32 (matches the PyTorch f32 nn.Linear), f32 acc.
    params = jnp.dot(
        x_ref[...],
        w_ref[...],
        preferred_element_type=jnp.float32,
        precision=jax.lax.Precision.HIGHEST,
    )
    params = params + b_ref[...]  # (1, 2Q) broadcasts over rows, f32.

    # Apply softplus only to the scale half using a lane mask; the whole
    # (TB, 2Q) tile is stored lane-dense (no in-kernel lane slicing / masked
    # stores).  softplus = logaddexp(x, 0) matches torch.nn.functional.softplus
    # semantics (it may underflow to 0.0 for x << -88, same as PyTorch).
    col = jax.lax.broadcasted_iota(jnp.int32, params.shape, dimension=1)
    soft = jnp.logaddexp(params, 0.0)  # EUP slot — free filler here.
    fused = jnp.where(col < q_dim, params, soft)

    out_ref[...] = fused.astype(out_ref.dtype)


# Conservative scoped-VMEM settings that are safe on v5e/v6e (128 MiB phys)
# and v7x (64 MiB phys).
_VMEM_LIMIT_BYTES = 32 * 1024 * 1024
_TILE_VMEM_BUDGET = 24 * 1024 * 1024


def _pick_batch_tile(batch, d, two_q, bytes_per_elem=4):
    """Largest sublane-aligned batch tile that divides B, fits the VMEM
    budget, and leaves at least 2 grid steps (pipelining + v7x megacore)."""
    # Tiny or ragged batches: single full-array block (always legal).
    if batch < 16 or batch % 8 != 0:
        return batch
    for tb in (4096, 2048, 1024, 512, 256, 128, 64, 32, 16, 8):
        if tb >= batch:          # would give grid=(1,): no pipelining / no megacore
            continue
        if batch % tb != 0:
            continue
        per_step = (
            2 * tb * (d + two_q) * bytes_per_elem          # double-buffered x + out tiles
            + (d * two_q + two_q) * bytes_per_elem         # resident weight + bias
        )
        if per_step > _TILE_VMEM_BUDGET:
            continue
        return tb
    return batch


def _build_distribution_head(B, D, two_q, TB, single_buffer_consts):
    """Construct the pallas_call for given static shapes / tile size."""
    grid = (B // TB,)
    const_kwargs = (
        dict(pipeline_mode=pl.Buffered(1)) if single_buffer_consts else {}
    )
    return pl.pallas_call(
        _dist_head_kernel,
        out_shape=jax.ShapeDtypeStruct((B, two_q), jnp.float32),
        grid_spec=pltpu.PrefetchScalarGridSpec(
            num_scalar_prefetch=0,
            grid=grid,
            in_specs=[
                pl.BlockSpec((TB, D), lambda i: (i, 0)),
                pl.BlockSpec((D, two_q), lambda i: (0, 0), **const_kwargs),
                pl.BlockSpec((1, two_q), lambda i: (0, 0), **const_kwargs),
            ],
            out_specs=pl.BlockSpec((TB, two_q), lambda i: (i, 0)),
        ),
        compiler_params=pltpu.CompilerParams(
            dimension_semantics=("parallel",),
            vmem_limit_bytes=_VMEM_LIMIT_BYTES,
        ),
    )


def base_distribution_forward(representation, weight, bias):
    """Pallas wrapper: representation (B, D) -> (loc (B, Q), scale (B, Q))."""
    B, D = representation.shape
    D_w, two_q = weight.shape
    assert D == D_w and two_q % 2 == 0
    Q = two_q // 2

    x = representation.astype(jnp.float32)      # no-op for f32 inputs
    w = weight.astype(jnp.float32)
    b = bias.reshape(1, two_q).astype(jnp.float32)

    TB = _pick_batch_tile(B, D, two_q)

    try:
        call = _build_distribution_head(B, D, two_q, TB, single_buffer_consts=True)
        params = call(x, w, b)
    except Exception:
        # Fallback if single-buffered BlockSpecs are not supported by this
        # JAX version: default (double-buffered) specs, otherwise identical.
        call = _build_distribution_head(B, D, two_q, TB, single_buffer_consts=False)
        params = call(x, w, b)

    # Lane slicing outside the kernel is free in XLA.
    loc = params[:, :Q]
    scale = params[:, Q:]
    return loc, scale


if __name__ == "__main__":
    # Shapes consistent with the module's forward:
    #   representation: (batch, d_model) = (256, 32)
    #   linear head:    d_model -> 2 * q_dim  (q_dim=64 -> loc, scale)
    B, D, Q = 256, 32, 64

    key = jax.random.PRNGKey(0)
    k_x, k_w, k_b = jax.random.split(key, 3)
    representation = jax.random.normal(k_x, (B, D), dtype=jnp.float32)
    weight = jax.random.normal(k_w, (D, 2 * Q), dtype=jnp.float32) * 0.05
    bias = jax.random.normal(k_b, (1, 2 * Q), dtype=jnp.float32) * 0.01

    loc, scale = base_distribution_forward(representation, weight, bias)
    jax.block_until_ready((loc, scale))

    # Reference check in plain f32 JAX (same semantics as the PyTorch Linear).
    params_ref = representation @ weight + bias
    loc_ref = params_ref[:, :Q]
    scale_ref = jnp.logaddexp(params_ref[:, Q:], 0.0)
    # Loose-ish tolerance to be robust to MXU f32 multi-pass rounding.
    assert jnp.allclose(loc, loc_ref, atol=2e-3, rtol=2e-3)
    assert jnp.allclose(scale, scale_ref, atol=2e-3, rtol=2e-3)
    assert bool(jnp.all(scale > 0))

    print("KERNEL_OK")
</pallas_src>

<mosaic_0001>
module attributes {stable_mosaic.version = 11 : i64} {
  func.func @_dist_head_kernel(%arg0: i32, %arg1: memref<128x32xf32, #tpu.memory_space<vmem>>, %arg2: memref<32x128xf32, #tpu.memory_space<vmem>>, %arg3: memref<1x128xf32, #tpu.memory_space<vmem>>, %arg4: memref<128x128xf32, #tpu.memory_space<vmem>>) attributes {dimension_semantics = [#tpu.dimension_semantics<parallel>], iteration_bounds = array<i64: 2>, scalar_prefetch = 0 : i64, scratch_operands = 0 : i64, tpu.core_type = #tpu.core_type<tc>, window_params = [{transform_indices = @transform_0, window_bounds = array<i64: 128, 32>}, {pipeline_mode = #tpu.pipeline_mode<synchronous>, transform_indices = @transform_1, window_bounds = array<i64: 32, 128>}, {pipeline_mode = #tpu.pipeline_mode<synchronous>, transform_indices = @transform_2, window_bounds = array<i64: 1, 128>}, {transform_indices = @transform_3, window_bounds = array<i64: 128, 128>}]} {
    %c0 = arith.constant 0 : index
    %c0_0 = arith.constant 0 : index
    %0 = vector.load %arg1[%c0, %c0_0] : memref<128x32xf32, #tpu.memory_space<vmem>>, vector<128x32xf32>
    %c0_1 = arith.constant 0 : index
    %c0_2 = arith.constant 0 : index
    %1 = vector.load %arg2[%c0_1, %c0_2] : memref<32x128xf32, #tpu.memory_space<vmem>>, vector<32x128xf32>
    %cst = arith.constant dense<0.000000e+00> : vector<128x128xf32>
    %2 = tpu.matmul %0, %1, %cst {dimension_numbers = #tpu.dot_dimension_numbers<[1], [0], [0], [1], [0, 0, 1, 1], [], []>, precision = #tpu.contract_precision<fp32>} : vector<128x32xf32>, vector<32x128xf32>, vector<128x128xf32> -> vector<128x128xf32>
    %c0_3 = arith.constant 0 : index
    %c0_4 = arith.constant 0 : index
    %3 = vector.load %arg3[%c0_3, %c0_4] : memref<1x128xf32, #tpu.memory_space<vmem>>, vector<1x128xf32>
    %4 = vector.broadcast %3 : vector<1x128xf32> to vector<128x128xf32>
    %5 = arith.addf %2, %4 : vector<128x128xf32>
    %6 = tpu.iota {dimensions = array<i32: 1>} : vector<128x128xi32>
    %cst_5 = arith.constant 0.000000e+00 : f32
    %7 = vector.broadcast %cst_5 : f32 to vector<128x128xf32>
    %8 = arith.maximumf %5, %7 : vector<128x128xf32>
    %9 = vector.broadcast %cst_5 : f32 to vector<128x128xf32>
    %10 = arith.subf %5, %9 : vector<128x128xf32>
    %11 = arith.cmpf one, %10, %10 : vector<128x128xf32>
    %12 = vector.broadcast %cst_5 : f32 to vector<128x128xf32>
    %13 = arith.addf %5, %12 : vector<128x128xf32>
    %14 = math.absf %10 : vector<128x128xf32>
    %cst_6 = arith.constant 0.000000e+00 : f32
    %15 = vector.broadcast %cst_6 : f32 to vector<128x128xf32>
    %16 = arith.subf %15, %14 : vector<128x128xf32>
    %17 = math.exp %16 : vector<128x128xf32>
    %18 = math.log1p %17 : vector<128x128xf32>
    %19 = arith.addf %8, %18 : vector<128x128xf32>
    %20 = arith.select %11, %13, %19 : vector<128x128xi1>, vector<128x128xf32>
    %c64_i32 = arith.constant 64 : i32
    %21 = vector.broadcast %c64_i32 : i32 to vector<128x128xi32>
    %22 = arith.cmpi slt, %6, %21 : vector<128x128xi32>
    %23 = arith.select %22, %5, %20 : vector<128x128xi1>, vector<128x128xf32>
    %c0_7 = arith.constant 0 : index
    %c0_8 = arith.constant 0 : index
    %24 = vector.load %arg4[%c0_7, %c0_8] : memref<128x128xf32, #tpu.memory_space<vmem>>, vector<128x128xf32>
    tpu.vector_store %arg4[%c0_7, %c0_8], %23 {strides = array<i32>} : memref<128x128xf32, #tpu.memory_space<vmem>>, vector<128x128xf32>,
    return
  }
  func.func @transform_0(%arg0: i32) -> (i32, i32) {
    %c0_i32 = arith.constant 0 : i32
    %c0_i32_0 = arith.constant 0 : i32
    return %arg0, %c0_i32 : i32, i32
  }
  func.func @transform_1(%arg0: i32) -> (i32, i32) {
    %c0_i32 = arith.constant 0 : i32
    %c0_i32_0 = arith.constant 0 : i32
    %c0_i32_1 = arith.constant 0 : i32
    return %c0_i32, %c0_i32_0 : i32, i32
  }
  func.func @transform_2(%arg0: i32) -> (i32, i32) {
    %c0_i32 = arith.constant 0 : i32
    %c0_i32_0 = arith.constant 0 : i32
    %c0_i32_1 = arith.constant 0 : i32
    return %c0_i32, %c0_i32_0 : i32, i32
  }
  func.func @transform_3(%arg0: i32) -> (i32, i32) {
    %c0_i32 = arith.constant 0 : i32
    %c0_i32_0 = arith.constant 0 : i32
    return %arg0, %c0_i32 : i32, i32
  }
}

module attributes {stable_mosaic.version = 11 : i64} {
  func.func @_dist_head_kernel(%arg0: i32, %arg1: memref<128x32xf32, #tpu.memory_space<vmem>>, %arg2: memref<32x128xf32, #tpu.memory_space<vmem>>, %arg3: memref<1x128xf32, #tpu.memory_space<vmem>>, %arg4: memref<128x128xf32, #tpu.memory_space<vmem>>) attributes {dimension_semantics = [#tpu.dimension_semantics<parallel>], iteration_bounds = array<i64: 2>, scalar_prefetch = 0 : i64, scratch_operands = 0 : i64, tpu.core_type = #tpu.core_type<tc>, window_params = [{transform_indices = @transform_0, window_bounds = array<i64: 128, 32>}, {pipeline_mode = #tpu.pipeline_mode<synchronous>, transform_indices = @transform_1, window_bounds = array<i64: 32, 128>}, {pipeline_mode = #tpu.pipeline_mode<synchronous>, transform_indices = @transform_2, window_bounds = array<i64: 1, 128>}, {transform_indices = @transform_3, window_bounds = array<i64: 128, 128>}]} {
    %c0 = arith.constant 0 : index
    %c0_0 = arith.constant 0 : index
    %0 = vector.load %arg1[%c0, %c0_0] : memref<128x32xf32, #tpu.memory_space<vmem>>, vector<128x32xf32>
    %c0_1 = arith.constant 0 : index
    %c0_2 = arith.constant 0 : index
    %1 = vector.load %arg2[%c0_1, %c0_2] : memref<32x128xf32, #tpu.memory_space<vmem>>, vector<32x128xf32>
    %cst = arith.constant dense<0.000000e+00> : vector<128x128xf32>
    %2 = tpu.matmul %0, %1, %cst {dimension_numbers = #tpu.dot_dimension_numbers<[1], [0], [0], [1], [0, 0, 1, 1], [], []>, precision = #tpu.contract_precision<fp32>} : vector<128x32xf32>, vector<32x128xf32>, vector<128x128xf32> -> vector<128x128xf32>
    %c0_3 = arith.constant 0 : index
    %c0_4 = arith.constant 0 : index
    %3 = vector.load %arg3[%c0_3, %c0_4] : memref<1x128xf32, #tpu.memory_space<vmem>>, vector<1x128xf32>
    %4 = vector.broadcast %3 : vector<1x128xf32> to vector<128x128xf32>
    %5 = arith.addf %2, %4 : vector<128x128xf32>
    %6 = tpu.iota {dimensions = array<i32: 1>} : vector<128x128xi32>
    %cst_5 = arith.constant 0.000000e+00 : f32
    %7 = vector.broadcast %cst_5 : f32 to vector<128x128xf32>
    %8 = arith.maximumf %5, %7 : vector<128x128xf32>
    %9 = vector.broadcast %cst_5 : f32 to vector<128x128xf32>
    %10 = arith.subf %5, %9 : vector<128x128xf32>
    %11 = arith.cmpf one, %10, %10 : vector<128x128xf32>
    %12 = vector.broadcast %cst_5 : f32 to vector<128x128xf32>
    %13 = arith.addf %5, %12 : vector<128x128xf32>
    %14 = math.absf %10 : vector<128x128xf32>
    %cst_6 = arith.constant 0.000000e+00 : f32
    %15 = vector.broadcast %cst_6 : f32 to vector<128x128xf32>
    %16 = arith.subf %15, %14 : vector<128x128xf32>
    %17 = math.exp %16 : vector<128x128xf32>
    %18 = math.log1p %17 : vector<128x128xf32>
    %19 = arith.addf %8, %18 : vector<128x128xf32>
    %20 = arith.select %11, %13, %19 : vector<128x128xi1>, vector<128x128xf32>
    %c64_i32 = arith.constant 64 : i32
    %21 = vector.broadcast %c64_i32 : i32 to vector<128x128xi32>
    %22 = arith.cmpi slt, %6, %21 : vector<128x128xi32>
    %23 = arith.select %22, %5, %20 : vector<128x128xi1>, vector<128x128xf32>
    %c0_7 = arith.constant 0 : index
    %c0_8 = arith.constant 0 : index
    %24 = vector.load %arg4[%c0_7, %c0_8] : memref<128x128xf32, #tpu.memory_space<vmem>>, vector<128x128xf32>
    tpu.vector_store %arg4[%c0_7, %c0_8], %23 {strides = array<i32>} : memref<128x128xf32, #tpu.memory_space<vmem>>, vector<128x128xf32>,
    return
  }
  func.func @transform_0(%arg0: i32) -> (i32, i32) {
    %c0_i32 = arith.constant 0 : i32
    %c0_i32_0 = arith.constant 0 : i32
    return %arg0, %c0_i32 : i32, i32
  }
  func.func @transform_1(%arg0: i32) -> (i32, i32) {
    %c0_i32 = arith.constant 0 : i32
    %c0_i32_0 = arith.constant 0 : i32
    %c0_i32_1 = arith.constant 0 : i32
    return %c0_i32, %c0_i32_0 : i32, i32
  }
  func.func @transform_2(%arg0: i32) -> (i32, i32) {
    %c0_i32 = arith.constant 0 : i32
    %c0_i32_0 = arith.constant 0 : i32
    %c0_i32_1 = arith.constant 0 : i32
    return %c0_i32, %c0_i32_0 : i32, i32
  }
  func.func @transform_3(%arg0: i32) -> (i32, i32) {
    %c0_i32 = arith.constant 0 : i32
    %c0_i32_0 = arith.constant 0 : i32
    return %arg0, %c0_i32 : i32, i32
  }
}

</mosaic_0001>

<llo_original>
// kernel: tpu_custom_call.1
$region0: #{tpu_custom_call.1}
  #allocation0 [shape = 'u32[]', space=smem, size = 0x4, offset = 0x4, fixed_abs, tag = 'smem constant byte address 0x4 - core index']
  #allocation1 [shape = 'u32[72,128]{1,0:T(1,128)}', space=vmem, size = 0x9000, scoped, tag = 'internal scratch']
  %s0 = inlined_call_operand.vmem [shape: f32[256,32], index: 0, kind: input, shape index: {}]
  %s1 = inlined_call_operand.vmem [shape: f32[32,128], index: 1, kind: input, shape index: {}]
  %s2 = inlined_call_operand.vmem [shape: f32[1,128], index: 2, kind: input, shape index: {}]
  %s3 = inlined_call_operand.hbm [shape: f32[256,128], index: 3, kind: output, shape index: {}]
  %s4 = sld [smem:[#allocation0]]
  $region45: #{tpu_custom_call.1} parent=0
    _
  %s6 = ssub.s32 1, %s4
  %s7 = scalar_select 0, %s6, %s4
  $region1: #{tpu_custom_call.1} parent=0
    #allocation2 [shape = 'u8[131072]{0}', space=vmem, size = 0x20000, scoped, tag = 'output window, operand 0']
    #allocation3 [shape = 's32[2]{0}', space=sflag, size = 0x8, scoped, tag = 'scoped memory for tpu_custom_call.1']
    %8 = vsyncpa [#allocation3], 0
    %s9 = scalar_lea.sflag [#allocation3], 1
    %10 = vsyncpa %s9, 0
    loop: start=0, step=1, limit=4
    $region2: #{tpu_custom_call.1} parent=1 // loop_pre_header
      _
    $region3: #{tpu_custom_call.1} parent=1 // loop_header
      %s12 = sphi 0, %s16
      %p13 = scmp.ge.s32.totalorder %s12, 4
      %s22 = sphi 0, %s24
      %s25 = sphi 0, %s22
      %s26 = sphi 0, %s25
      %s42 = sphi 0, %s26
      %s46 = sphi 0, %s46
      %s48 = sphi 0, %s46
      %s49 = sphi 0, %s48
      %s63 = sphi 0, %s49
      %s67 = sphi 0, %s67
      %s69 = sphi 0, %s67
      %s70 = sphi 0, %s69
      %s84 = sphi 0, %s70
      %s90 = sphi 0, %s92
      %s93 = sphi 0, %s90
      %s94 = sphi 0, %s93
      %s110 = sphi 0, %s94
    $region4: #{tpu_custom_call.1} parent=1 // loop_header_branch
      %15 = sbr.rel (%p13) target = $region8
    $region5: #{tpu_custom_call.1} parent=1 // loop_body
      %s17 = ssub.s32 %s12, 1
      %s18 = ssub.s32 %s12, 2
      %s19 = sadd.s32 %s12, 1
      %s20 = ssub.s32 %s12, %s19
      %p21 = scmp.eq.s32.totalorder %s20, 0
      %s23 = sadd.s32 %s22, 1
      %s24 = scalar_select %p21, %s22, %s23
      %p27 = pneg %p21
      %p28 = scmp.eq.s32.totalorder %s12, 1
      %p29 = por %p27, %p28
      %p30 = scmp.ne.s32.totalorder %s22, %s25
      %p31 = scmp.eq.s32.totalorder %s12, 0
      %p32 = por %p30, %p31
      %p33 = scmp.ne.s32.totalorder %s22, %s25
      %p34 = scmp.eq.s32.totalorder %s17, 1
      %p35 = por %p33, %p34
      %p36 = scmp.ne.s32.totalorder %s25, %s26
      %p37 = scmp.eq.s32.totalorder %s17, 0
      %p38 = por %p36, %p37
      %p39 = scmp.ne.s32.totalorder %s25, %s26
      %p40 = scmp.eq.s32.totalorder %s18, 1
      %p41 = por %p39, %p40
      %p43 = scmp.ne.s32.totalorder %s26, %s42
      %p44 = scmp.eq.s32.totalorder %s18, 0
      %p45 = por %p43, %p44
      %s47 = sadd.s32 %s46, 1
      %p50 = scmp.eq.s32.totalorder %s12, 1
      %p51 = scmp.ne.s32.totalorder %s46, %s48
      %p52 = scmp.eq.s32.totalorder %s12, 0
      %p53 = por %p51, %p52
      %p54 = scmp.ne.s32.totalorder %s46, %s48
      %p55 = scmp.eq.s32.totalorder %s17, 1
      %p56 = por %p54, %p55
      %p57 = scmp.ne.s32.totalorder %s48, %s49
      %p58 = scmp.eq.s32.totalorder %s17, 0
      %p59 = por %p57, %p58
      %p60 = scmp.ne.s32.totalorder %s48, %s49
      %p61 = scmp.eq.s32.totalorder %s18, 1
      %p62 = por %p60, %p61
      %p64 = scmp.ne.s32.totalorder %s49, %s63
      %p65 = scmp.eq.s32.totalorder %s18, 0
      %p66 = por %p64, %p65
      %s68 = sadd.s32 %s67, 1
      %p71 = scmp.eq.s32.totalorder %s12, 1
      %p72 = scmp.ne.s32.totalorder %s67, %s69
      %p73 = scmp.eq.s32.totalorder %s12, 0
      %p74 = por %p72, %p73
      %p75 = scmp.ne.s32.totalorder %s67, %s69
      %p76 = scmp.eq.s32.totalorder %s17, 1
      %p77 = por %p75, %p76
      %p78 = scmp.ne.s32.totalorder %s69, %s70
      %p79 = scmp.eq.s32.totalorder %s17, 0
      %p80 = por %p78, %p79
      %p81 = scmp.ne.s32.totalorder %s69, %s70
      %p82 = scmp.eq.s32.totalorder %s18, 1
      %p83 = por %p81, %p82
      %p85 = scmp.ne.s32.totalorder %s70, %s84
      %p86 = scmp.eq.s32.totalorder %s18, 0
      %p87 = por %p85, %p86
      %s88 = ssub.s32 %s12, %s19
      %p89 = scmp.eq.s32.totalorder %s88, 0
      %s91 = sadd.s32 %s90, 1
      %s92 = scalar_select %p89, %s90, %s91
      %p95 = pneg %p89
      %p96 = scmp.eq.s32.totalorder %s12, 1
      %p97 = por %p95, %p96
      %p98 = scmp.ne.s32.totalorder %s90, %s93
      %p99 = scmp.eq.s32.totalorder %s12, 0
      %p100 = por %p98, %p99
      %p101 = scmp.ne.s32.totalorder %s90, %s93
      %p102 = scmp.eq.s32.totalorder %s17, 1
      %p103 = por %p101, %p102
      %p104 = scmp.ne.s32.totalorder %s93, %s94
      %p105 = scmp.eq.s32.totalorder %s17, 0
      %p106 = por %p104, %p105
      %p107 = scmp.ne.s32.totalorder %s93, %s94
      %p108 = scmp.eq.s32.totalorder %s18, 1
      %p109 = por %p107, %p108
      %p111 = scmp.ne.s32.totalorder %s94, %s110
      %p112 = scmp.eq.s32.totalorder %s18, 0
      %p113 = por %p111, %p112
      %p114 = scmp.le.s32.totalorder 1, %s12
      %p115 = scmp.lt.s32.totalorder %s12, 3
      %p116 = pnand %p114, %p115
      %p117 = pneg %p116
      // Predicated region
      $region9: #{tpu_custom_call.1} parent=5 // pred_check
        _
      $region10: #{tpu_custom_call.1} parent=5 // pred_check_branch
        %119 = sbr.rel (%p116) target = $region12
      $region11: #{tpu_custom_call.1} parent=5 // pred_region
        %s120 = ssub.s32 %s12, 1
        // Predicated region
        $region13: #{tpu_custom_call.1} parent=11 // pred_check
          %p121 = pneg %p59
        $region14: #{tpu_custom_call.1} parent=11 // pred_check_branch
          %123 = sbr.rel (%p121) target = $region16
        $region15: #{tpu_custom_call.1} parent=11 // pred_region
          _
        $region16: #{tpu_custom_call.1} parent=11 // pred_fallthru
          _
        // Predicated region
        $region17: #{tpu_custom_call.1} parent=11 // pred_check
          %p124 = pneg %p80
        $region18: #{tpu_custom_call.1} parent=11 // pred_check_branch
          %126 = sbr.rel (%p124) target = $region20
        $region19: #{tpu_custom_call.1} parent=11 // pred_region
          _
        $region20: #{tpu_custom_call.1} parent=11 // pred_fallthru
          _
      $region12: #{tpu_custom_call.1} parent=5 // pred_fallthru
        _
      %p127 = scmp.lt.s32.totalorder %s12, 2
      // Predicated region
      $region21: #{tpu_custom_call.1} parent=5 // pred_check
        %p128 = pneg %p127
      $region22: #{tpu_custom_call.1} parent=5 // pred_check_branch
        %130 = sbr.rel (%p128) target = $region24
      $region23: #{tpu_custom_call.1} parent=5 // pred_region
        // Predicated region
        $region25: #{tpu_custom_call.1} parent=23 // pred_check
          %p131 = pneg %p32
        $region26: #{tpu_custom_call.1} parent=23 // pred_check_branch
          %133 = sbr.rel (%p131) target = $region28
        $region27: #{tpu_custom_call.1} parent=23 // pred_region
          %s134 = smul.u32 16, %s12
          %p135 = scmp.lt.s32.totalorder %s134, 31
          %s136 = scalar_select %p135, %s134, 31
          %s137 = smul.addr %s136, 8
          %s138 = scalar_lea.vmem %s0, %s137
          %s139 = smul.u32 16, %s12
        $region28: #{tpu_custom_call.1} parent=23 // pred_fallthru
          _
      $region24: #{tpu_custom_call.1} parent=5 // pred_fallthru
        _
      %p140 = scmp.le.s32.totalorder 1, %s12
      %p141 = scmp.lt.s32.totalorder %s12, 3
      %p142 = pnand %p140, %p141
      %p143 = pneg %p142
      // Predicated region
      $region29: #{tpu_custom_call.1} parent=5 // pred_check
        _
      $region30: #{tpu_custom_call.1} parent=5 // pred_check_branch
        %145 = sbr.rel (%p142) target = $region32
      $region31: #{tpu_custom_call.1} parent=5 // pred_region
        %s146 = ssub.s32 %s12, 1
        %s147 = smul.u32 16, %s17
        %p148 = scmp.lt.s32.totalorder %s147, 31
        %s149 = scalar_select %p148, %s147, 31
        %s150 = smul.addr %s149, 8
        %s151 = scalar_lea.vmem %s0, %s150
        %p152 = pneg %p38
        %p153 = pneg %p35
        %p154 = pneg %p59
        %p155 = pneg %p56
        %p156 = pneg %p80
        %p157 = pneg %p77
        %p158 = pneg %p106
        %p159 = pneg %p103
        %s160 = sand.u32 %s93, 1
        %s161 = scalar_lea.sflag [#allocation3], %s160
        %s162 = sand.u32 %s93, 1
        %s163 = smul.addr %s162, 128
        %s164 = scalar_lea.vmem [#allocation2], %s163
        %s165 = smul.u32 16, %s17
        %p166 = scmp.lt.s32.totalorder %s165, 31
        %s167 = scalar_select %p166, %s165, 31
        %s168 = smul.addr %s167, 8
        %s169 = scalar_lea.vmem %s0, %s168
        %s170 = smul.u32 16, %s17
        %s171 = smul.u32 16, %s17
        %v172 = vld [vmem:[%s169] sm:$0xff]
        %v173 = vld [vmem:[%s169 + $0x8] sm:$0xff]
        %v174 = vld [vmem:[%s169 + $0x10] sm:$0xff]
        %v175 = vld [vmem:[%s169 + $0x18] sm:$0xff]
        %v176 = vld [vmem:[%s169 + $0x20] sm:$0xff]
        %v177 = vld [vmem:[%s169 + $0x28] sm:$0xff]
        %v178 = vld [vmem:[%s169 + $0x30] sm:$0xff]
        %v179 = vld [vmem:[%s169 + $0x38] sm:$0xff]
        %v180 = vld [vmem:[%s169 + $0x40] sm:$0xff]
        %v181 = vld [vmem:[%s169 + $0x48] sm:$0xff]
        %v182 = vld [vmem:[%s169 + $0x50] sm:$0xff]
        %v183 = vld [vmem:[%s169 + $0x58] sm:$0xff]
        %v184 = vld [vmem:[%s169 + $0x60] sm:$0xff]
        %v185 = vld [vmem:[%s169 + $0x68] sm:$0xff]
        %v186 = vld [vmem:[%s169 + $0x70] sm:$0xff]
        %v187 = vld [vmem:[%s169 + $0x78] sm:$0xff]
        %v188 = vld [vmem:[%s1] sm:$0xff]
        %v189 = vld [vmem:[%s1 + $0x8] sm:$0xff]
        %v190 = vld [vmem:[%s1 + $0x10] sm:$0xff]
        %v191 = vld [vmem:[%s1 + $0x18] sm:$0xff]
        %v192 = vld [vmem:[%s2] sm:$0x1]
        %v194 = vperm.slane %v192, 0
        %vm196 = vcmask 261120
        %v198 = vsel %vm196, %v172, 0
        %v201 = vsel %vm196, %v173, 0
        %v204 = vsel %vm196, %v174, 0
        %v207 = vsel %vm196, %v175, 0
        %v210 = vsel %vm196, %v176, 0
        %v213 = vsel %vm196, %v177, 0
        %v216 = vsel %vm196, %v178, 0
        %v219 = vsel %vm196, %v179, 0
        %v222 = vsel %vm196, %v180, 0
        %v225 = vsel %vm196, %v181, 0
        %v228 = vsel %vm196, %v182, 0
        %v231 = vsel %vm196, %v183, 0
        %v234 = vsel %vm196, %v184, 0
        %v237 = vsel %vm196, %v185, 0
        %v240 = vsel %vm196, %v186, 0
        %v243 = vsel %vm196, %v187, 0
        %245 = vmatpush.msra.mxu0 0.0
        %246 = vmatpush.msra.mxu0 0.0
        %247 = vmatpush.msra.mxu0 0.0
        %248 = vmatpush.msra.mxu0 0.0
        %249 = vmatpush.msra.mxu0 0.0
        %250 = vmatpush.msra.mxu0 0.0
        %251 = vmatpush.msra.mxu0 0.0
        %252 = vmatpush.msra.mxu0 0.0
        %253 = vmatpush.msra.mxu0 0.0
        %254 = vmatpush.msra.mxu0 0.0
        %255 = vmatpush.msra.mxu0 0.0
        %256 = vmatpush.msra.mxu0 0.0
        %v257 = vand.u32 %v191, 4294901760
        %258 = vmatpush.msra.mxu0 %v257
        %v259 = vand.u32 %v190, 4294901760
        %260 = vmatpush.msra.mxu0 %v259
        %v261 = vand.u32 %v189, 4294901760
        %262 = vmatpush.msra.mxu0 %v261
        %v263 = vand.u32 %v188, 4294901760
        %264 = vmatpush.msra.mxu0 %v263
        %v265 = vand.u32 %v198, 4294901760
        %v266 = vsub.f32 %v198, %v265
        %v267 = vand.u32 %v266, 4294901760
        %v268 = vsub.f32 %v266, %v267
        %v269 = vand.u32 %v268, 4294901760
        %270 = vmatmul.f32.gmra.mxu0 %v269
        %v271 = vpop.f32.mrf.mxu0
        %v272 = vadd.f32 %v194, %v271
        %v273 = vand.u32 %v201, 4294901760
        %v274 = vsub.f32 %v201, %v273
        %v275 = vand.u32 %v274, 4294901760
        %v276 = vsub.f32 %v274, %v275
        %v277 = vand.u32 %v276, 4294901760
        %278 = vmatmul.f32.gmra.mxu0 %v277
        %v279 = vpop.f32.mrf.mxu0
        %v280 = vadd.f32 %v194, %v279
        %v281 = vand.u32 %v204, 4294901760
        %v282 = vsub.f32 %v204, %v281
        %v283 = vand.u32 %v282, 4294901760
        %v284 = vsub.f32 %v282, %v283
        %v285 = vand.u32 %v284, 4294901760
        %286 = vmatmul.f32.gmra.mxu0 %v285
        %v287 = vpop.f32.mrf.mxu0
        %v288 = vadd.f32 %v194, %v287
        %v289 = vand.u32 %v207, 4294901760
        %v290 = vsub.f32 %v207, %v289
        %v291 = vand.u32 %v290, 4294901760
        %v292 = vsub.f32 %v290, %v291
        %v293 = vand.u32 %v292, 4294901760
        %294 = vmatmul.f32.gmra.mxu0 %v293
        %v295 = vpop.f32.mrf.mxu0
        %v296 = vadd.f32 %v194, %v295
        %v297 = vand.u32 %v210, 4294901760
        %v298 = vsub.f32 %v210, %v297
        %v299 = vand.u32 %v298, 4294901760
        %v300 = vsub.f32 %v298, %v299
        %v301 = vand.u32 %v300, 4294901760
        %302 = vmatmul.f32.gmra.mxu0 %v301
        %v303 = vpop.f32.mrf.mxu0
        %v304 = vadd.f32 %v194, %v303
        %v305 = vand.u32 %v213, 4294901760
        %v306 = vsub.f32 %v213, %v305
        %v307 = vand.u32 %v306, 4294901760
        %v308 = vsub.f32 %v306, %v307
        %v309 = vand.u32 %v308, 4294901760
        %310 = vmatmul.f32.gmra.mxu0 %v309
        %v311 = vpop.f32.mrf.mxu0
        %v312 = vadd.f32 %v194, %v311
        %v313 = vand.u32 %v216, 4294901760
        %v314 = vsub.f32 %v216, %v313
        %v315 = vand.u32 %v314, 4294901760
        %v316 = vsub.f32 %v314, %v315
        %v317 = vand.u32 %v316, 4294901760
        %318 = vmatmul.f32.gmra.mxu0 %v317
        %v319 = vpop.f32.mrf.mxu0
        %v320 = vadd.f32 %v194, %v319
        %v321 = vand.u32 %v219, 4294901760
        %v322 = vsub.f32 %v219, %v321
        %v323 = vand.u32 %v322, 4294901760
        %v324 = vsub.f32 %v322, %v323
        %v325 = vand.u32 %v324, 4294901760
        %326 = vmatmul.f32.gmra.mxu0 %v325
        %v327 = vpop.f32.mrf.mxu0
        %v328 = vadd.f32 %v194, %v327
        %v329 = vand.u32 %v222, 4294901760
        %v330 = vsub.f32 %v222, %v329
        %v331 = vand.u32 %v330, 4294901760
        %v332 = vsub.f32 %v330, %v331
        %v333 = vand.u32 %v332, 4294901760
        %334 = vmatmul.f32.gmra.mxu0 %v333
        %v335 = vpop.f32.mrf.mxu0
        %v336 = vadd.f32 %v194, %v335
        %v337 = vand.u32 %v225, 4294901760
        %v338 = vsub.f32 %v225, %v337
        %v339 = vand.u32 %v338, 4294901760
        %v340 = vsub.f32 %v338, %v339
        %v341 = vand.u32 %v340, 4294901760
        %342 = vmatmul.f32.gmra.mxu0 %v341
        %v343 = vpop.f32.mrf.mxu0
        %v344 = vadd.f32 %v194, %v343
        %v345 = vand.u32 %v228, 4294901760
        %v346 = vsub.f32 %v228, %v345
        %v347 = vand.u32 %v346, 4294901760
        %v348 = vsub.f32 %v346, %v347
        %v349 = vand.u32 %v348, 4294901760
        %350 = vmatmul.f32.gmra.mxu0 %v349
        %v351 = vpop.f32.mrf.mxu0
        %v352 = vadd.f32 %v194, %v351
        %v353 = vand.u32 %v231, 4294901760
        %v354 = vsub.f32 %v231, %v353
        %v355 = vand.u32 %v354, 4294901760
        %v356 = vsub.f32 %v354, %v355
        %v357 = vand.u32 %v356, 4294901760
        %358 = vmatmul.f32.gmra.mxu0 %v357
        %v359 = vpop.f32.mrf.mxu0
        %v360 = vadd.f32 %v194, %v359
        %v361 = vand.u32 %v234, 4294901760
        %v362 = vsub.f32 %v234, %v361
        %v363 = vand.u32 %v362, 4294901760
        %v364 = vsub.f32 %v362, %v363
        %v365 = vand.u32 %v364, 4294901760
        %366 = vmatmul.f32.gmra.mxu0 %v365
        %v367 = vpop.f32.mrf.mxu0
        %v368 = vadd.f32 %v194, %v367
        %v369 = vand.u32 %v237, 4294901760
        %v370 = vsub.f32 %v237, %v369
        %v371 = vand.u32 %v370, 4294901760
        %v372 = vsub.f32 %v370, %v371
        %v373 = vand.u32 %v372, 4294901760
        %374 = vmatmul.f32.gmra.mxu0 %v373
        %v375 = vpop.f32.mrf.mxu0
        %v376 = vadd.f32 %v194, %v375
        %v377 = vand.u32 %v240, 4294901760
        %v378 = vsub.f32 %v240, %v377
        %v379 = vand.u32 %v378, 4294901760
        %v380 = vsub.f32 %v378, %v379
        %v381 = vand.u32 %v380, 4294901760
        %382 = vmatmul.f32.gmra.mxu0 %v381
        %v383 = vpop.f32.mrf.mxu0
        %v384 = vadd.f32 %v194, %v383
        %v385 = vand.u32 %v243, 4294901760
        %v386 = vsub.f32 %v243, %v385
        %v387 = vand.u32 %v386, 4294901760
        %v388 = vsub.f32 %v386, %v387
        %v389 = vand.u32 %v388, 4294901760
        %390 = vmatmul.f32.gmra.mxu0 %v389
        %v391 = vpop.f32.mrf.mxu0
        %v392 = vadd.f32 %v194, %v391
        %393 = vdwg.mxu0
        %394 = vmatpush.msra.mxu0 0.0
        %395 = vmatpush.msra.mxu0 0.0
        %396 = vmatpush.msra.mxu0 0.0
        %397 = vmatpush.msra.mxu0 0.0
        %398 = vmatpush.msra.mxu0 0.0
        %399 = vmatpush.msra.mxu0 0.0
        %400 = vmatpush.msra.mxu0 0.0
        %401 = vmatpush.msra.mxu0 0.0
        %402 = vmatpush.msra.mxu0 0.0
        %403 = vmatpush.msra.mxu0 0.0
        %404 = vmatpush.msra.mxu0 0.0
        %405 = vmatpush.msra.mxu0 0.0
        %v406 = vand.u32 %v191, 4294901760
        %v407 = vsub.f32 %v191, %v406
        %v408 = vand.u32 %v407, 4294901760
        %v409 = vsub.f32 %v407, %v408
        %v410 = vand.u32 %v409, 4294901760
        %411 = vmatpush.msra.mxu0 %v410
        %v412 = vand.u32 %v190, 4294901760
        %v413 = vsub.f32 %v190, %v412
        %v414 = vand.u32 %v413, 4294901760
        %v415 = vsub.f32 %v413, %v414
        %v416 = vand.u32 %v415, 4294901760
        %417 = vmatpush.msra.mxu0 %v416
        %v418 = vand.u32 %v189, 4294901760
        %v419 = vsub.f32 %v189, %v418
        %v420 = vand.u32 %v419, 4294901760
        %v421 = vsub.f32 %v419, %v420
        %v422 = vand.u32 %v421, 4294901760
        %423 = vmatpush.msra.mxu0 %v422
        %v424 = vand.u32 %v188, 4294901760
        %v425 = vsub.f32 %v188, %v424
        %v426 = vand.u32 %v425, 4294901760
        %v427 = vsub.f32 %v425, %v426
        %v428 = vand.u32 %v427, 4294901760
        %429 = vmatpush.msra.mxu0 %v428
        %v430 = vand.u32 %v198, 4294901760
        %431 = vmatmul.f32.gmra.mxu0 %v430
        %v432 = vpop.f32.mrf.mxu0
        %v433 = vadd.f32 %v272, %v432
        %v434 = vand.u32 %v201, 4294901760
        %435 = vmatmul.f32.gmra.mxu0 %v434
        %v436 = vpop.f32.mrf.mxu0
        %v437 = vadd.f32 %v280, %v436
        %v438 = vand.u32 %v204, 4294901760
        %439 = vmatmul.f32.gmra.mxu0 %v438
        %v440 = vpop.f32.mrf.mxu0
        %v441 = vadd.f32 %v288, %v440
        %v442 = vand.u32 %v207, 4294901760
        %443 = vmatmul.f32.gmra.mxu0 %v442
        %v444 = vpop.f32.mrf.mxu0
        %v445 = vadd.f32 %v296, %v444
        %v446 = vand.u32 %v210, 4294901760
        %447 = vmatmul.f32.gmra.mxu0 %v446
        %v448 = vpop.f32.mrf.mxu0
        %v449 = vadd.f32 %v304, %v448
        %v450 = vand.u32 %v213, 4294901760
        %451 = vmatmul.f32.gmra.mxu0 %v450
        %v452 = vpop.f32.mrf.mxu0
        %v453 = vadd.f32 %v312, %v452
        %v454 = vand.u32 %v216, 4294901760
        %455 = vmatmul.f32.gmra.mxu0 %v454
        %v456 = vpop.f32.mrf.mxu0
        %v457 = vadd.f32 %v320, %v456
        %v458 = vand.u32 %v219, 4294901760
        %459 = vmatmul.f32.gmra.mxu0 %v458
        %v460 = vpop.f32.mrf.mxu0
        %v461 = vadd.f32 %v328, %v460
        %v462 = vand.u32 %v222, 4294901760
        %463 = vmatmul.f32.gmra.mxu0 %v462
        %v464 = vpop.f32.mrf.mxu0
        %v465 = vadd.f32 %v336, %v464
        %v466 = vand.u32 %v225, 4294901760
        %467 = vmatmul.f32.gmra.mxu0 %v466
        %v468 = vpop.f32.mrf.mxu0
        %v469 = vadd.f32 %v344, %v468
        %v470 = vand.u32 %v228, 4294901760
        %471 = vmatmul.f32.gmra.mxu0 %v470
        %v472 = vpop.f32.mrf.mxu0
        %v473 = vadd.f32 %v352, %v472
        %v474 = vand.u32 %v231, 4294901760
        %475 = vmatmul.f32.gmra.mxu0 %v474
        %v476 = vpop.f32.mrf.mxu0
        %v477 = vadd.f32 %v360, %v476
        %v478 = vand.u32 %v234, 4294901760
        %479 = vmatmul.f32.gmra.mxu0 %v478
        %v480 = vpop.f32.mrf.mxu0
        %v481 = vadd.f32 %v368, %v480
        %v482 = vand.u32 %v237, 4294901760
        %483 = vmatmul.f32.gmra.mxu0 %v482
        %v484 = vpop.f32.mrf.mxu0
        %v485 = vadd.f32 %v376, %v484
        %v486 = vand.u32 %v240, 4294901760
        %487 = vmatmul.f32.gmra.mxu0 %v486
        %v488 = vpop.f32.mrf.mxu0
        %v489 = vadd.f32 %v384, %v488
        %v490 = vand.u32 %v243, 4294901760
        %491 = vmatmul.f32.gmra.mxu0 %v490
        %v492 = vpop.f32.mrf.mxu0
        %v493 = vadd.f32 %v392, %v492
        %494 = vdwg.mxu0
        %495 = vmatpush.msra.mxu0 0.0
        %496 = vmatpush.msra.mxu0 0.0
        %497 = vmatpush.msra.mxu0 0.0
        %498 = vmatpush.msra.mxu0 0.0
        %499 = vmatpush.msra.mxu0 0.0
        %500 = vmatpush.msra.mxu0 0.0
        %501 = vmatpush.msra.mxu0 0.0
        %502 = vmatpush.msra.mxu0 0.0
        %503 = vmatpush.msra.mxu0 0.0
        %504 = vmatpush.msra.mxu0 0.0
        %505 = vmatpush.msra.mxu0 0.0
        %506 = vmatpush.msra.mxu0 0.0
        %v507 = vand.u32 %v191, 4294901760
        %v508 = vsub.f32 %v191, %v507
        %509 = vmatpush.msra.mxu0 %v508
        %v510 = vand.u32 %v190, 4294901760
        %v511 = vsub.f32 %v190, %v510
        %512 = vmatpush.msra.mxu0 %v511
        %v513 = vand.u32 %v189, 4294901760
        %v514 = vsub.f32 %v189, %v513
        %515 = vmatpush.msra.mxu0 %v514
        %v516 = vand.u32 %v188, 4294901760
        %v517 = vsub.f32 %v188, %v516
        %518 = vmatpush.msra.mxu0 %v517
        %v519 = vand.u32 %v198, 4294901760
        %v520 = vsub.f32 %v198, %v519
        %521 = vmatmul.f32.gmra.mxu0 %v520
        %v522 = vpop.f32.mrf.mxu0
        %v523 = vadd.f32 %v433, %v522
        %v524 = vand.u32 %v201, 4294901760
        %v525 = vsub.f32 %v201, %v524
        %526 = vmatmul.f32.gmra.mxu0 %v525
        %v527 = vpop.f32.mrf.mxu0
        %v528 = vadd.f32 %v437, %v527
        %v529 = vand.u32 %v204, 4294901760
        %v530 = vsub.f32 %v204, %v529
        %531 = vmatmul.f32.gmra.mxu0 %v530
        %v532 = vpop.f32.mrf.mxu0
        %v533 = vadd.f32 %v441, %v532
        %v534 = vand.u32 %v207, 4294901760
        %v535 = vsub.f32 %v207, %v534
        %536 = vmatmul.f32.gmra.mxu0 %v535
        %v537 = vpop.f32.mrf.mxu0
        %v538 = vadd.f32 %v445, %v537
        %v539 = vand.u32 %v210, 4294901760
        %v540 = vsub.f32 %v210, %v539
        %541 = vmatmul.f32.gmra.mxu0 %v540
        %v542 = vpop.f32.mrf.mxu0
        %v543 = vadd.f32 %v449, %v542
        %v544 = vand.u32 %v213, 4294901760
        %v545 = vsub.f32 %v213, %v544
        %546 = vmatmul.f32.gmra.mxu0 %v545
        %v547 = vpop.f32.mrf.mxu0
        %v548 = vadd.f32 %v453, %v547
        %v549 = vand.u32 %v216, 4294901760
        %v550 = vsub.f32 %v216, %v549
        %551 = vmatmul.f32.gmra.mxu0 %v550
        %v552 = vpop.f32.mrf.mxu0
        %v553 = vadd.f32 %v457, %v552
        %v554 = vand.u32 %v219, 4294901760
        %v555 = vsub.f32 %v219, %v554
        %556 = vmatmul.f32.gmra.mxu0 %v555
        %v557 = vpop.f32.mrf.mxu0
        %v558 = vadd.f32 %v461, %v557
        %v559 = vand.u32 %v222, 4294901760
        %v560 = vsub.f32 %v222, %v559
        %561 = vmatmul.f32.gmra.mxu0 %v560
        %v562 = vpop.f32.mrf.mxu0
        %v563 = vadd.f32 %v465, %v562
        %v564 = vand.u32 %v225, 4294901760
        %v565 = vsub.f32 %v225, %v564
        %566 = vmatmul.f32.gmra.mxu0 %v565
        %v567 = vpop.f32.mrf.mxu0
        %v568 = vadd.f32 %v469, %v567
        %v569 = vand.u32 %v228, 4294901760
        %v570 = vsub.f32 %v228, %v569
        %571 = vmatmul.f32.gmra.mxu0 %v570
        %v572 = vpop.f32.mrf.mxu0
        %v573 = vadd.f32 %v473, %v572
        %v574 = vand.u32 %v231, 4294901760
        %v575 = vsub.f32 %v231, %v574
        %576 = vmatmul.f32.gmra.mxu0 %v575
        %v577 = vpop.f32.mrf.mxu0
        %v578 = vadd.f32 %v477, %v577
        %v579 = vand.u32 %v234, 4294901760
        %v580 = vsub.f32 %v234, %v579
        %581 = vmatmul.f32.gmra.mxu0 %v580
        %v582 = vpop.f32.mrf.mxu0
        %v583 = vadd.f32 %v481, %v582
        %v584 = vand.u32 %v237, 4294901760
        %v585 = vsub.f32 %v237, %v584
        %586 = vmatmul.f32.gmra.mxu0 %v585
        %v587 = vpop.f32.mrf.mxu0
        %v588 = vadd.f32 %v485, %v587
        %v589 = vand.u32 %v240, 4294901760
        %v590 = vsub.f32 %v240, %v589
        %591 = vmatmul.f32.gmra.mxu0 %v590
        %v592 = vpop.f32.mrf.mxu0
        %v593 = vadd.f32 %v489, %v592
        %v594 = vand.u32 %v243, 4294901760
        %v595 = vsub.f32 %v243, %v594
        %596 = vmatmul.f32.gmra.mxu0 %v595
        %v597 = vpop.f32.mrf.mxu0
        %v598 = vadd.f32 %v493, %v597
        %599 = vdwg.mxu0
        %600 = vmatpush.msra.mxu0 0.0
        %601 = vmatpush.msra.mxu0 0.0
        %602 = vmatpush.msra.mxu0 0.0
        %603 = vmatpush.msra.mxu0 0.0
        %604 = vmatpush.msra.mxu0 0.0
        %605 = vmatpush.msra.mxu0 0.0
        %606 = vmatpush.msra.mxu0 0.0
        %607 = vmatpush.msra.mxu0 0.0
        %608 = vmatpush.msra.mxu0 0.0
        %609 = vmatpush.msra.mxu0 0.0
        %610 = vmatpush.msra.mxu0 0.0
        %611 = vmatpush.msra.mxu0 0.0
        %v612 = vand.u32 %v191, 4294901760
        %613 = vmatpush.msra.mxu0 %v612
        %v614 = vand.u32 %v190, 4294901760
        %615 = vmatpush.msra.mxu0 %v614
        %v616 = vand.u32 %v189, 4294901760
        %617 = vmatpush.msra.mxu0 %v616
        %v618 = vand.u32 %v188, 4294901760
        %619 = vmatpush.msra.mxu0 %v618
        %v620 = vand.u32 %v198, 4294901760
        %v621 = vsub.f32 %v198, %v620
        %v622 = vand.u32 %v621, 4294901760
        %623 = vmatmul.f32.gmra.mxu0 %v622
        %v624 = vpop.f32.mrf.mxu0
        %v625 = vadd.f32 %v523, %v624
        %v626 = vand.u32 %v201, 4294901760
        %v627 = vsub.f32 %v201, %v626
        %v628 = vand.u32 %v627, 4294901760
        %629 = vmatmul.f32.gmra.mxu0 %v628
        %v630 = vpop.f32.mrf.mxu0
        %v631 = vadd.f32 %v528, %v630
        %v632 = vand.u32 %v204, 4294901760
        %v633 = vsub.f32 %v204, %v632
        %v634 = vand.u32 %v633, 4294901760
        %635 = vmatmul.f32.gmra.mxu0 %v634
        %v636 = vpop.f32.mrf.mxu0
        %v637 = vadd.f32 %v533, %v636
        %v638 = vand.u32 %v207, 4294901760
        %v639 = vsub.f32 %v207, %v638
        %v640 = vand.u32 %v639, 4294901760
        %641 = vmatmul.f32.gmra.mxu0 %v640
        %v642 = vpop.f32.mrf.mxu0
        %v643 = vadd.f32 %v538, %v642
        %v644 = vand.u32 %v210, 4294901760
        %v645 = vsub.f32 %v210, %v644
        %v646 = vand.u32 %v645, 4294901760
        %647 = vmatmul.f32.gmra.mxu0 %v646
        %v648 = vpop.f32.mrf.mxu0
        %v649 = vadd.f32 %v543, %v648
        %v650 = vand.u32 %v213, 4294901760
        %v651 = vsub.f32 %v213, %v650
        %v652 = vand.u32 %v651, 4294901760
        %653 = vmatmul.f32.gmra.mxu0 %v652
        %v654 = vpop.f32.mrf.mxu0
        %v655 = vadd.f32 %v548, %v654
        %v656 = vand.u32 %v216, 4294901760
        %v657 = vsub.f32 %v216, %v656
        %v658 = vand.u32 %v657, 4294901760
        %659 = vmatmul.f32.gmra.mxu0 %v658
        %v660 = vpop.f32.mrf.mxu0
        %v661 = vadd.f32 %v553, %v660
        %v662 = vand.u32 %v219, 4294901760
        %v663 = vsub.f32 %v219, %v662
        %v664 = vand.u32 %v663, 4294901760
        %665 = vmatmul.f32.gmra.mxu0 %v664
        %v666 = vpop.f32.mrf.mxu0
        %v667 = vadd.f32 %v558, %v666
        %v668 = vand.u32 %v222, 4294901760
        %v669 = vsub.f32 %v222, %v668
        %v670 = vand.u32 %v669, 4294901760
        %671 = vmatmul.f32.gmra.mxu0 %v670
        %v672 = vpop.f32.mrf.mxu0
        %v673 = vadd.f32 %v563, %v672
        %v674 = vand.u32 %v225, 4294901760
        %v675 = vsub.f32 %v225, %v674
        %v676 = vand.u32 %v675, 4294901760
        %677 = vmatmul.f32.gmra.mxu0 %v676
        %v678 = vpop.f32.mrf.mxu0
        %v679 = vadd.f32 %v568, %v678
        %v680 = vand.u32 %v228, 4294901760
        %v681 = vsub.f32 %v228, %v680
        %v682 = vand.u32 %v681, 4294901760
        %683 = vmatmul.f32.gmra.mxu0 %v682
        %v684 = vpop.f32.mrf.mxu0
        %v685 = vadd.f32 %v573, %v684
        %v686 = vand.u32 %v231, 4294901760
        %v687 = vsub.f32 %v231, %v686
        %v688 = vand.u32 %v687, 4294901760
        %689 = vmatmul.f32.gmra.mxu0 %v688
        %v690 = vpop.f32.mrf.mxu0
        %v691 = vadd.f32 %v578, %v690
        %v692 = vand.u32 %v234, 4294901760
        %v693 = vsub.f32 %v234, %v692
        %v694 = vand.u32 %v693, 4294901760
        %695 = vmatmul.f32.gmra.mxu0 %v694
        %v696 = vpop.f32.mrf.mxu0
        %v697 = vadd.f32 %v583, %v696
        %v698 = vand.u32 %v237, 4294901760
        %v699 = vsub.f32 %v237, %v698
        %v700 = vand.u32 %v699, 4294901760
        %701 = vmatmul.f32.gmra.mxu0 %v700
        %v702 = vpop.f32.mrf.mxu0
        %v703 = vadd.f32 %v588, %v702
        %v704 = vand.u32 %v240, 4294901760
        %v705 = vsub.f32 %v240, %v704
        %v706 = vand.u32 %v705, 4294901760
        %707 = vmatmul.f32.gmra.mxu0 %v706
        %v708 = vpop.f32.mrf.mxu0
        %v709 = vadd.f32 %v593, %v708
        %v710 = vand.u32 %v243, 4294901760
        %v711 = vsub.f32 %v243, %v710
        %v712 = vand.u32 %v711, 4294901760
        %713 = vmatmul.f32.gmra.mxu0 %v712
        %v714 = vpop.f32.mrf.mxu0
        %v715 = vadd.f32 %v598, %v714
        %716 = vdwg.mxu0
        %717 = vmatpush.msra.mxu0 0.0
        %718 = vmatpush.msra.mxu0 0.0
        %719 = vmatpush.msra.mxu0 0.0
        %720 = vmatpush.msra.mxu0 0.0
        %721 = vmatpush.msra.mxu0 0.0
        %722 = vmatpush.msra.mxu0 0.0
        %723 = vmatpush.msra.mxu0 0.0
        %724 = vmatpush.msra.mxu0 0.0
        %725 = vmatpush.msra.mxu0 0.0
        %726 = vmatpush.msra.mxu0 0.0
        %727 = vmatpush.msra.mxu0 0.0
        %728 = vmatpush.msra.mxu0 0.0
        %v729 = vand.u32 %v191, 4294901760
        %v730 = vsub.f32 %v191, %v729
        %v731 = vand.u32 %v730, 4294901760
        %732 = vmatpush.msra.mxu0 %v731
        %v733 = vand.u32 %v190, 4294901760
        %v734 = vsub.f32 %v190, %v733
        %v735 = vand.u32 %v734, 4294901760
        %736 = vmatpush.msra.mxu0 %v735
        %v737 = vand.u32 %v189, 4294901760
        %v738 = vsub.f32 %v189, %v737
        %v739 = vand.u32 %v738, 4294901760
        %740 = vmatpush.msra.mxu0 %v739
        %v741 = vand.u32 %v188, 4294901760
        %v742 = vsub.f32 %v188, %v741
        %v743 = vand.u32 %v742, 4294901760
        %744 = vmatpush.msra.mxu0 %v743
        %v745 = vand.u32 %v198, 4294901760
        %746 = vmatmul.f32.gmra.mxu0 %v745
        %v747 = vpop.f32.mrf.mxu0
        %v748 = vadd.f32 %v625, %v747
        %v749 = vand.u32 %v201, 4294901760
        %750 = vmatmul.f32.gmra.mxu0 %v749
        %v751 = vpop.f32.mrf.mxu0
        %v752 = vadd.f32 %v631, %v751
        %v753 = vand.u32 %v204, 4294901760
        %754 = vmatmul.f32.gmra.mxu0 %v753
        %v755 = vpop.f32.mrf.mxu0
        %v756 = vadd.f32 %v637, %v755
        %v757 = vand.u32 %v207, 4294901760
        %758 = vmatmul.f32.gmra.mxu0 %v757
        %v759 = vpop.f32.mrf.mxu0
        %v760 = vadd.f32 %v643, %v759
        %v761 = vand.u32 %v210, 4294901760
        %762 = vmatmul.f32.gmra.mxu0 %v761
        %v763 = vpop.f32.mrf.mxu0
        %v764 = vadd.f32 %v649, %v763
        %v765 = vand.u32 %v213, 4294901760
        %766 = vmatmul.f32.gmra.mxu0 %v765
        %v767 = vpop.f32.mrf.mxu0
        %v768 = vadd.f32 %v655, %v767
        %v769 = vand.u32 %v216, 4294901760
        %770 = vmatmul.f32.gmra.mxu0 %v769
        %v771 = vpop.f32.mrf.mxu0
        %v772 = vadd.f32 %v661, %v771
        %v773 = vand.u32 %v219, 4294901760
        %774 = vmatmul.f32.gmra.mxu0 %v773
        %v775 = vpop.f32.mrf.mxu0
        %v776 = vadd.f32 %v667, %v775
        %v777 = vand.u32 %v222, 4294901760
        %778 = vmatmul.f32.gmra.mxu0 %v777
        %v779 = vpop.f32.mrf.mxu0
        %v780 = vadd.f32 %v673, %v779
        %v781 = vand.u32 %v225, 4294901760
        %782 = vmatmul.f32.gmra.mxu0 %v781
        %v783 = vpop.f32.mrf.mxu0
        %v784 = vadd.f32 %v679, %v783
        %v785 = vand.u32 %v228, 4294901760
        %786 = vmatmul.f32.gmra.mxu0 %v785
        %v787 = vpop.f32.mrf.mxu0
        %v788 = vadd.f32 %v685, %v787
        %v789 = vand.u32 %v231, 4294901760
        %790 = vmatmul.f32.gmra.mxu0 %v789
        %v791 = vpop.f32.mrf.mxu0
        %v792 = vadd.f32 %v691, %v791
        %v793 = vand.u32 %v234, 4294901760
        %794 = vmatmul.f32.gmra.mxu0 %v793
        %v795 = vpop.f32.mrf.mxu0
        %v796 = vadd.f32 %v697, %v795
        %v797 = vand.u32 %v237, 4294901760
        %798 = vmatmul.f32.gmra.mxu0 %v797
        %v799 = vpop.f32.mrf.mxu0
        %v800 = vadd.f32 %v703, %v799
        %v801 = vand.u32 %v240, 4294901760
        %802 = vmatmul.f32.gmra.mxu0 %v801
        %v803 = vpop.f32.mrf.mxu0
        %v804 = vadd.f32 %v709, %v803
        %v805 = vand.u32 %v243, 4294901760
        %806 = vmatmul.f32.gmra.mxu0 %v805
        %v807 = vpop.f32.mrf.mxu0
        %v808 = vadd.f32 %v715, %v807
        %809 = vdwg.mxu0
        %810 = vmatpush.msra.mxu0 0.0
        %811 = vmatpush.msra.mxu0 0.0
        %812 = vmatpush.msra.mxu0 0.0
        %813 = vmatpush.msra.mxu0 0.0
        %814 = vmatpush.msra.mxu0 0.0
        %815 = vmatpush.msra.mxu0 0.0
        %816 = vmatpush.msra.mxu0 0.0
        %817 = vmatpush.msra.mxu0 0.0
        %818 = vmatpush.msra.mxu0 0.0
        %819 = vmatpush.msra.mxu0 0.0
        %820 = vmatpush.msra.mxu0 0.0
        %821 = vmatpush.msra.mxu0 0.0
        %v822 = vand.u32 %v191, 4294901760
        %823 = vmatpush.msra.mxu0 %v822
        %v824 = vand.u32 %v190, 4294901760
        %825 = vmatpush.msra.mxu0 %v824
        %v826 = vand.u32 %v189, 4294901760
        %827 = vmatpush.msra.mxu0 %v826
        %v828 = vand.u32 %v188, 4294901760
        %829 = vmatpush.msra.mxu0 %v828
        %v830 = vand.u32 %v198, 4294901760
        %831 = vmatmul.f32.gmra.mxu0 %v830
        %v832 = vpop.f32.mrf.mxu0
        %v833 = vadd.f32 %v748, %v832
        %v834 = vand.u32 %v201, 4294901760
        %835 = vmatmul.f32.gmra.mxu0 %v834
        %v836 = vpop.f32.mrf.mxu0
        %v837 = vadd.f32 %v752, %v836
        %v838 = vand.u32 %v204, 4294901760
        %839 = vmatmul.f32.gmra.mxu0 %v838
        %v840 = vpop.f32.mrf.mxu0
        %v841 = vadd.f32 %v756, %v840
        %v842 = vand.u32 %v207, 4294901760
        %843 = vmatmul.f32.gmra.mxu0 %v842
        %v844 = vpop.f32.mrf.mxu0
        %v845 = vadd.f32 %v760, %v844
        %v846 = vand.u32 %v210, 4294901760
        %847 = vmatmul.f32.gmra.mxu0 %v846
        %v848 = vpop.f32.mrf.mxu0
        %v849 = vadd.f32 %v764, %v848
        %v850 = vand.u32 %v213, 4294901760
        %851 = vmatmul.f32.gmra.mxu0 %v850
        %v852 = vpop.f32.mrf.mxu0
        %v853 = vadd.f32 %v768, %v852
        %v854 = vand.u32 %v216, 4294901760
        %855 = vmatmul.f32.gmra.mxu0 %v854
        %v856 = vpop.f32.mrf.mxu0
        %v857 = vadd.f32 %v772, %v856
        %v858 = vand.u32 %v219, 4294901760
        %859 = vmatmul.f32.gmra.mxu0 %v858
        %v860 = vpop.f32.mrf.mxu0
        %v861 = vadd.f32 %v776, %v860
        %v862 = vand.u32 %v222, 4294901760
        %863 = vmatmul.f32.gmra.mxu0 %v862
        %v864 = vpop.f32.mrf.mxu0
        %v865 = vadd.f32 %v780, %v864
        %v866 = vand.u32 %v225, 4294901760
        %867 = vmatmul.f32.gmra.mxu0 %v866
        %v868 = vpop.f32.mrf.mxu0
        %v869 = vadd.f32 %v784, %v868
        %v870 = vand.u32 %v228, 4294901760
        %871 = vmatmul.f32.gmra.mxu0 %v870
        %v872 = vpop.f32.mrf.mxu0
        %v873 = vadd.f32 %v788, %v872
        %v874 = vand.u32 %v231, 4294901760
        %875 = vmatmul.f32.gmra.mxu0 %v874
        %v876 = vpop.f32.mrf.mxu0
        %v877 = vadd.f32 %v792, %v876
        %v878 = vand.u32 %v234, 4294901760
        %879 = vmatmul.f32.gmra.mxu0 %v878
        %v880 = vpop.f32.mrf.mxu0
        %v881 = vadd.f32 %v796, %v880
        %v882 = vand.u32 %v237, 4294901760
        %883 = vmatmul.f32.gmra.mxu0 %v882
        %v884 = vpop.f32.mrf.mxu0
        %v885 = vadd.f32 %v800, %v884
        %v886 = vand.u32 %v240, 4294901760
        %887 = vmatmul.f32.gmra.mxu0 %v886
        %v888 = vpop.f32.mrf.mxu0
        %v889 = vadd.f32 %v804, %v888
        %v890 = vand.u32 %v243, 4294901760
        %891 = vmatmul.f32.gmra.mxu0 %v890
        %v892 = vpop.f32.mrf.mxu0
        %v893 = vadd.f32 %v808, %v892
        %894 = vdwg.mxu0
        %v895 = vlaneseq
        %v896 = vand.u32 %v895, 127
        %v897 = vmax.f32 %v833, 0.0
        %v898 = vmax.f32 %v837, 0.0
        %v899 = vmax.f32 %v841, 0.0
        %v900 = vmax.f32 %v845, 0.0
        %v901 = vmax.f32 %v849, 0.0
        %v902 = vmax.f32 %v853, 0.0
        %v903 = vmax.f32 %v857, 0.0
        %v904 = vmax.f32 %v861, 0.0
        %v905 = vmax.f32 %v865, 0.0
        %v906 = vmax.f32 %v869, 0.0
        %v907 = vmax.f32 %v873, 0.0
        %v908 = vmax.f32 %v877, 0.0
        %v909 = vmax.f32 %v881, 0.0
        %v910 = vmax.f32 %v885, 0.0
        %v911 = vmax.f32 %v889, 0.0
        %v912 = vmax.f32 %v893, 0.0
        %vm913 = vcmp.ne.f32.partialorder %v833, %v833
        %vm914 = vcmp.ne.f32.partialorder %v837, %v837
        %vm915 = vcmp.ne.f32.partialorder %v841, %v841
        %vm916 = vcmp.ne.f32.partialorder %v845, %v845
        %vm917 = vcmp.ne.f32.partialorder %v849, %v849
        %vm918 = vcmp.ne.f32.partialorder %v853, %v853
        %vm919 = vcmp.ne.f32.partialorder %v857, %v857
        %vm920 = vcmp.ne.f32.partialorder %v861, %v861
        %vm921 = vcmp.ne.f32.partialorder %v865, %v865
        %vm922 = vcmp.ne.f32.partialorder %v869, %v869
        %vm923 = vcmp.ne.f32.partialorder %v873, %v873
        %vm924 = vcmp.ne.f32.partialorder %v877, %v877
        %vm925 = vcmp.ne.f32.partialorder %v881, %v881
        %vm926 = vcmp.ne.f32.partialorder %v885, %v885
        %vm927 = vcmp.ne.f32.partialorder %v889, %v889
        %vm928 = vcmp.ne.f32.partialorder %v893, %v893
        %v929 = vadd.f32 %v833, 0.0
        %v930 = vadd.f32 %v837, 0.0
        %v931 = vadd.f32 %v841, 0.0
        %v932 = vadd.f32 %v845, 0.0
        %v933 = vadd.f32 %v849, 0.0
        %v934 = vadd.f32 %v853, 0.0
        %v935 = vadd.f32 %v857, 0.0
        %v936 = vadd.f32 %v861, 0.0
        %v937 = vadd.f32 %v865, 0.0
        %v938 = vadd.f32 %v869, 0.0
        %v939 = vadd.f32 %v873, 0.0
        %v940 = vadd.f32 %v877, 0.0
        %v941 = vadd.f32 %v881, 0.0
        %v942 = vadd.f32 %v885, 0.0
        %v943 = vadd.f32 %v889, 0.0
        %v944 = vadd.f32 %v893, 0.0
        %v945 = vand.u32 2147483647, %v833
        %v946 = vand.u32 2147483647, %v837
        %v947 = vand.u32 2147483647, %v841
        %v948 = vand.u32 2147483647, %v845
        %v949 = vand.u32 2147483647, %v849
        %v950 = vand.u32 2147483647, %v853
        %v951 = vand.u32 2147483647, %v857
        %v952 = vand.u32 2147483647, %v861
        %v953 = vand.u32 2147483647, %v865
        %v954 = vand.u32 2147483647, %v869
        %v955 = vand.u32 2147483647, %v873
        %v956 = vand.u32 2147483647, %v877
        %v957 = vand.u32 2147483647, %v881
        %v958 = vand.u32 2147483647, %v885
        %v959 = vand.u32 2147483647, %v889
        %v960 = vand.u32 2147483647, %v893
        %v961 = vsub.f32 0.0, %v945
        %v962 = vsub.f32 0.0, %v946
        %v963 = vsub.f32 0.0, %v947
        %v964 = vsub.f32 0.0, %v948
        %v965 = vsub.f32 0.0, %v949
        %v966 = vsub.f32 0.0, %v950
        %v967 = vsub.f32 0.0, %v951
        %v968 = vsub.f32 0.0, %v952
        %v969 = vsub.f32 0.0, %v953
        %v970 = vsub.f32 0.0, %v954
        %v971 = vsub.f32 0.0, %v955
        %v972 = vsub.f32 0.0, %v956
        %v973 = vsub.f32 0.0, %v957
        %v974 = vsub.f32 0.0, %v958
        %v975 = vsub.f32 0.0, %v959
        %v976 = vsub.f32 0.0, %v960
        %v977 = vmul.f32 %v961, 1.442695
        %v978 = vpow.pop %v977
        %v979 = vmul.f32 %v962, 1.442695
        %v980 = vpow.pop %v979
        %v981 = vmul.f32 %v963, 1.442695
        %v982 = vpow.pop %v981
        %v983 = vmul.f32 %v964, 1.442695
        %v984 = vpow.pop %v983
        %v985 = vmul.f32 %v965, 1.442695
        %v986 = vpow.pop %v985
        %v987 = vmul.f32 %v966, 1.442695
        %v988 = vpow.pop %v987
        %v989 = vmul.f32 %v967, 1.442695
        %v990 = vpow.pop %v989
        %v991 = vmul.f32 %v968, 1.442695
        %v992 = vpow.pop %v991
        %v993 = vmul.f32 %v969, 1.442695
        %v994 = vpow.pop %v993
        %v995 = vmul.f32 %v970, 1.442695
        %v996 = vpow.pop %v995
        %v997 = vmul.f32 %v971, 1.442695
        %v998 = vpow.pop %v997
        %v999 = vmul.f32 %v972, 1.442695
        %v1000 = vpow.pop %v999
        %v1001 = vmul.f32 %v973, 1.442695
        %v1002 = vpow.pop %v1001
        %v1003 = vmul.f32 %v974, 1.442695
        %v1004 = vpow.pop %v1003
        %v1005 = vmul.f32 %v975, 1.442695
        %v1006 = vpow.pop %v1005
        %v1007 = vmul.f32 %v976, 1.442695
        %v1008 = vpow.pop %v1007
        %v1009 = vadd.f32 %v978, 1.0
        %v1010 = vlog2.pop %v1009
        %v1011 = vmul.f32 %v1010, 0.6931472
        %v1012 = vmul.f32 -0.5, %v978
        %v1013 = vadd.f32 %v1012, 1.0
        %v1014 = vmul.f32 %v1013, %v978
        %v1015 = vand.u32 2147483647, %v978
        %vm1016 = vcmp.lt.f32.partialorder %v1015, 0.0004427343
        %v1017 = vsel %vm1016, %v1014, %v1011
        %v1018 = vadd.f32 %v980, 1.0
        %v1019 = vlog2.pop %v1018
        %v1020 = vmul.f32 %v1019, 0.6931472
        %v1021 = vmul.f32 -0.5, %v980
        %v1022 = vadd.f32 %v1021, 1.0
        %v1023 = vmul.f32 %v1022, %v980
        %v1024 = vand.u32 2147483647, %v980
        %vm1025 = vcmp.lt.f32.partialorder %v1024, 0.0004427343
        %v1026 = vsel %vm1025, %v1023, %v1020
        %v1027 = vadd.f32 %v982, 1.0
        %v1028 = vlog2.pop %v1027
        %v1029 = vmul.f32 %v1028, 0.6931472
        %v1030 = vmul.f32 -0.5, %v982
        %v1031 = vadd.f32 %v1030, 1.0
        %v1032 = vmul.f32 %v1031, %v982
        %v1033 = vand.u32 2147483647, %v982
        %vm1034 = vcmp.lt.f32.partialorder %v1033, 0.0004427343
        %v1035 = vsel %vm1034, %v1032, %v1029
        %v1036 = vadd.f32 %v984, 1.0
        %v1037 = vlog2.pop %v1036
        %v1038 = vmul.f32 %v1037, 0.6931472
        %v1039 = vmul.f32 -0.5, %v984
        %v1040 = vadd.f32 %v1039, 1.0
        %v1041 = vmul.f32 %v1040, %v984
        %v1042 = vand.u32 2147483647, %v984
        %vm1043 = vcmp.lt.f32.partialorder %v1042, 0.0004427343
        %v1044 = vsel %vm1043, %v1041, %v1038
        %v1045 = vadd.f32 %v986, 1.0
        %v1046 = vlog2.pop %v1045
        %v1047 = vmul.f32 %v1046, 0.6931472
        %v1048 = vmul.f32 -0.5, %v986
        %v1049 = vadd.f32 %v1048, 1.0
        %v1050 = vmul.f32 %v1049, %v986
        %v1051 = vand.u32 2147483647, %v986
        %vm1052 = vcmp.lt.f32.partialorder %v1051, 0.0004427343
        %v1053 = vsel %vm1052, %v1050, %v1047
        %v1054 = vadd.f32 %v988, 1.0
        %v1055 = vlog2.pop %v1054
        %v1056 = vmul.f32 %v1055, 0.6931472
        %v1057 = vmul.f32 -0.5, %v988
        %v1058 = vadd.f32 %v1057, 1.0
        %v1059 = vmul.f32 %v1058, %v988
        %v1060 = vand.u32 2147483647, %v988
        %vm1061 = vcmp.lt.f32.partialorder %v1060, 0.0004427343
        %v1062 = vsel %vm1061, %v1059, %v1056
        %v1063 = vadd.f32 %v990, 1.0
        %v1064 = vlog2.pop %v1063
        %v1065 = vmul.f32 %v1064, 0.6931472
        %v1066 = vmul.f32 -0.5, %v990
        %v1067 = vadd.f32 %v1066, 1.0
        %v1068 = vmul.f32 %v1067, %v990
        %v1069 = vand.u32 2147483647, %v990
        %vm1070 = vcmp.lt.f32.partialorder %v1069, 0.0004427343
        %v1071 = vsel %vm1070, %v1068, %v1065
        %v1072 = vadd.f32 %v992, 1.0
        %v1073 = vlog2.pop %v1072
        %v1074 = vmul.f32 %v1073, 0.6931472
        %v1075 = vmul.f32 -0.5, %v992
        %v1076 = vadd.f32 %v1075, 1.0
        %v1077 = vmul.f32 %v1076, %v992
        %v1078 = vand.u32 2147483647, %v992
        %vm1079 = vcmp.lt.f32.partialorder %v1078, 0.0004427343
        %v1080 = vsel %vm1079, %v1077, %v1074
        %v1081 = vadd.f32 %v994, 1.0
        %v1082 = vlog2.pop %v1081
        %v1083 = vmul.f32 %v1082, 0.6931472
        %v1084 = vmul.f32 -0.5, %v994
        %v1085 = vadd.f32 %v1084, 1.0
        %v1086 = vmul.f32 %v1085, %v994
        %v1087 = vand.u32 2147483647, %v994
        %vm1088 = vcmp.lt.f32.partialorder %v1087, 0.0004427343
        %v1089 = vsel %vm1088, %v1086, %v1083
        %v1090 = vadd.f32 %v996, 1.0
        %v1091 = vlog2.pop %v1090
        %v1092 = vmul.f32 %v1091, 0.6931472
        %v1093 = vmul.f32 -0.5, %v996
        %v1094 = vadd.f32 %v1093, 1.0
        %v1095 = vmul.f32 %v1094, %v996
        %v1096 = vand.u32 2147483647, %v996
        %vm1097 = vcmp.lt.f32.partialorder %v1096, 0.0004427343
        %v1098 = vsel %vm1097, %v1095, %v1092
        %v1099 = vadd.f32 %v998, 1.0
        %v1100 = vlog2.pop %v1099
        %v1101 = vmul.f32 %v1100, 0.6931472
        %v1102 = vmul.f32 -0.5, %v998
        %v1103 = vadd.f32 %v1102, 1.0
        %v1104 = vmul.f32 %v1103, %v998
        %v1105 = vand.u32 2147483647, %v998
        %vm1106 = vcmp.lt.f32.partialorder %v1105, 0.0004427343
        %v1107 = vsel %vm1106, %v1104, %v1101
        %v1108 = vadd.f32 %v1000, 1.0
        %v1109 = vlog2.pop %v1108
        %v1110 = vmul.f32 %v1109, 0.6931472
        %v1111 = vmul.f32 -0.5, %v1000
        %v1112 = vadd.f32 %v1111, 1.0
        %v1113 = vmul.f32 %v1112, %v1000
        %v1114 = vand.u32 2147483647, %v1000
        %vm1115 = vcmp.lt.f32.partialorder %v1114, 0.0004427343
        %v1116 = vsel %vm1115, %v1113, %v1110
        %v1117 = vadd.f32 %v1002, 1.0
        %v1118 = vlog2.pop %v1117
        %v1119 = vmul.f32 %v1118, 0.6931472
        %v1120 = vmul.f32 -0.5, %v1002
        %v1121 = vadd.f32 %v1120, 1.0
        %v1122 = vmul.f32 %v1121, %v1002
        %v1123 = vand.u32 2147483647, %v1002
        %vm1124 = vcmp.lt.f32.partialorder %v1123, 0.0004427343
        %v1125 = vsel %vm1124, %v1122, %v1119
        %v1126 = vadd.f32 %v1004, 1.0
        %v1127 = vlog2.pop %v1126
        %v1128 = vmul.f32 %v1127, 0.6931472
        %v1129 = vmul.f32 -0.5, %v1004
        %v1130 = vadd.f32 %v1129, 1.0
        %v1131 = vmul.f32 %v1130, %v1004
        %v1132 = vand.u32 2147483647, %v1004
        %vm1133 = vcmp.lt.f32.partialorder %v1132, 0.0004427343
        %v1134 = vsel %vm1133, %v1131, %v1128
        %v1135 = vadd.f32 %v1006, 1.0
        %v1136 = vlog2.pop %v1135
        %v1137 = vmul.f32 %v1136, 0.6931472
        %v1138 = vmul.f32 -0.5, %v1006
        %v1139 = vadd.f32 %v1138, 1.0
        %v1140 = vmul.f32 %v1139, %v1006
        %v1141 = vand.u32 2147483647, %v1006
        %vm1142 = vcmp.lt.f32.partialorder %v1141, 0.0004427343
        %v1143 = vsel %vm1142, %v1140, %v1137
        %v1144 = vadd.f32 %v1008, 1.0
        %v1145 = vlog2.pop %v1144
        %v1146 = vmul.f32 %v1145, 0.6931472
        %v1147 = vmul.f32 -0.5, %v1008
        %v1148 = vadd.f32 %v1147, 1.0
        %v1149 = vmul.f32 %v1148, %v1008
        %v1150 = vand.u32 2147483647, %v1008
        %vm1151 = vcmp.lt.f32.partialorder %v1150, 0.0004427343
        %v1152 = vsel %vm1151, %v1149, %v1146
        %v1153 = vadd.f32 %v897, %v1017
        %v1154 = vadd.f32 %v898, %v1026
        %v1155 = vadd.f32 %v899, %v1035
        %v1156 = vadd.f32 %v900, %v1044
        %v1157 = vadd.f32 %v901, %v1053
        %v1158 = vadd.f32 %v902, %v1062
        %v1159 = vadd.f32 %v903, %v1071
        %v1160 = vadd.f32 %v904, %v1080
        %v1161 = vadd.f32 %v905, %v1089
        %v1162 = vadd.f32 %v906, %v1098
        %v1163 = vadd.f32 %v907, %v1107
        %v1164 = vadd.f32 %v908, %v1116
        %v1165 = vadd.f32 %v909, %v1125
        %v1166 = vadd.f32 %v910, %v1134
        %v1167 = vadd.f32 %v911, %v1143
        %v1168 = vadd.f32 %v912, %v1152
        %v1169 = vsel %vm913, %v929, %v1153
        %v1170 = vsel %vm914, %v930, %v1154
        %v1171 = vsel %vm915, %v931, %v1155
        %v1172 = vsel %vm916, %v932, %v1156
        %v1173 = vsel %vm917, %v933, %v1157
        %v1174 = vsel %vm918, %v934, %v1158
        %v1175 = vsel %vm919, %v935, %v1159
        %v1176 = vsel %vm920, %v936, %v1160
        %v1177 = vsel %vm921, %v937, %v1161
        %v1178 = vsel %vm922, %v938, %v1162
        %v1179 = vsel %vm923, %v939, %v1163
        %v1180 = vsel %vm924, %v940, %v1164
        %v1181 = vsel %vm925, %v941, %v1165
        %v1182 = vsel %vm926, %v942, %v1166
        %v1183 = vsel %vm927, %v943, %v1167
        %v1184 = vsel %vm928, %v944, %v1168
        %vm1185 = vcmp.lt.s32.totalorder %v896, 64
        %v1186 = vsel %vm1185, %v833, %v1169
        %v1187 = vsel %vm1185, %v837, %v1170
        %v1188 = vsel %vm1185, %v841, %v1171
        %v1189 = vsel %vm1185, %v845, %v1172
        %v1190 = vsel %vm1185, %v849, %v1173
        %v1191 = vsel %vm1185, %v853, %v1174
        %v1192 = vsel %vm1185, %v857, %v1175
        %v1193 = vsel %vm1185, %v861, %v1176
        %v1194 = vsel %vm1185, %v865, %v1177
        %v1195 = vsel %vm1185, %v869, %v1178
        %v1196 = vsel %vm1185, %v873, %v1179
        %v1197 = vsel %vm1185, %v877, %v1180
        %v1198 = vsel %vm1185, %v881, %v1181
        %v1199 = vsel %vm1185, %v885, %v1182
        %v1200 = vsel %vm1185, %v889, %v1183
        %v1201 = vsel %vm1185, %v893, %v1184
        %1202 = vst [vmem:[%s164] sm:$0xff] %v1186
        %1203 = vst [vmem:[%s164 + $0x8] sm:$0xff] %v1187
        %1204 = vst [vmem:[%s164 + $0x10] sm:$0xff] %v1188
        %1205 = vst [vmem:[%s164 + $0x18] sm:$0xff] %v1189
        %1206 = vst [vmem:[%s164 + $0x20] sm:$0xff] %v1190
        %1207 = vst [vmem:[%s164 + $0x28] sm:$0xff] %v1191
        %1208 = vst [vmem:[%s164 + $0x30] sm:$0xff] %v1192
        %1209 = vst [vmem:[%s164 + $0x38] sm:$0xff] %v1193
        %1210 = vst [vmem:[%s164 + $0x40] sm:$0xff] %v1194
        %1211 = vst [vmem:[%s164 + $0x48] sm:$0xff] %v1195
        %1212 = vst [vmem:[%s164 + $0x50] sm:$0xff] %v1196
        %1213 = vst [vmem:[%s164 + $0x58] sm:$0xff] %v1197
        %1214 = vst [vmem:[%s164 + $0x60] sm:$0xff] %v1198
        %1215 = vst [vmem:[%s164 + $0x68] sm:$0xff] %v1199
        %1216 = vst [vmem:[%s164 + $0x70] sm:$0xff] %v1200
        %1217 = vst [vmem:[%s164 + $0x78] sm:$0xff] %v1201
        %s1218 = sand.u32 %s93, 1
        %s1219 = scalar_lea.sflag [#allocation3], %s1218
        %s1220 = sand.u32 %s93, 1
        %s1221 = smul.addr %s1220, 128
        %s1222 = scalar_lea.vmem [#allocation2], %s1221
        // Predicated region
        $region33: #{tpu_custom_call.1} parent=31 // pred_check
          %p1223 = pneg %p103
        $region34: #{tpu_custom_call.1} parent=31 // pred_check_branch
          %1225 = sbr.rel (%p1223) target = $region36
        $region35: #{tpu_custom_call.1} parent=31 // pred_region
          %s1226 = smul.u32 16, %s17
          %1228 = vsyncadd %s1219, 0
          %s1229 = smul.addr %s1226, 8
          %s1230 = scalar_lea.hbm %s3, %s1229
          %s1231 = sshll.u32 %s1222, 4
          %s1232 = int_to_ptr.vmem [resolvable:$true] %s1231
          %s1233 = sshll.u32 %s1230, 4
          %s1234 = int_to_ptr.hbm [resolvable:$true] %s1233
          %1239 = dma.vmem_to_hbm [thread:$0]  %s1232, 2048, %s1234, %s1219, 128, 128, 8
        $region36: #{tpu_custom_call.1} parent=31 // pred_fallthru
          _
      $region32: #{tpu_custom_call.1} parent=5 // pred_fallthru
        _
      %p1240 = scmp.le.s32.totalorder 2, %s12
      // Predicated region
      $region37: #{tpu_custom_call.1} parent=5 // pred_check
        %p1241 = pneg %p1240
      $region38: #{tpu_custom_call.1} parent=5 // pred_check_branch
        %1243 = sbr.rel (%p1241) target = $region40
      $region39: #{tpu_custom_call.1} parent=5 // pred_region
        %s1244 = ssub.s32 %s12, 2
        // Predicated region
        $region41: #{tpu_custom_call.1} parent=39 // pred_check
          %p1245 = pneg %p109
        $region42: #{tpu_custom_call.1} parent=39 // pred_check_branch
          %1247 = sbr.rel (%p1245) target = $region44
        $region43: #{tpu_custom_call.1} parent=39 // pred_region
          %s1248 = sand.u32 %s94, 1
          %s1249 = scalar_lea.sflag [#allocation3], %s1248
          %s1250 = sand.u32 %s94, 1
          %s1251 = smul.addr %s1250, 128
          %s1252 = scalar_lea.vmem [#allocation2], %s1251
          %1254 = dma.done %s1249, 2048
        $region44: #{tpu_custom_call.1} parent=39 // pred_fallthru
          _
      $region40: #{tpu_custom_call.1} parent=5 // pred_fallthru
        _
    $region6: #{tpu_custom_call.1} parent=1 // loop_footer
      %s16 = sadd.s32 1, %s12
    $region7: #{tpu_custom_call.1} parent=1 // loop_footer_branch
      %11 = sbr.rel target = $region3
    $region8: #{tpu_custom_call.1} parent=1 // loop_exit
      _
    %1255 = vsyncpa [#allocation3], 1
    %s1256 = scalar_lea.sflag [#allocation3], 1
    %1257 = vsyncpa %s1256, 1

// kernel: tpu_custom_call.1
$region0: #{tpu_custom_call.1}
  #allocation0 [shape = 'u32[]', space=smem, size = 0x4, offset = 0x4, fixed_abs, tag = 'smem constant byte address 0x4 - core index']
  #allocation1 [shape = 'u32[72,128]{1,0:T(1,128)}', space=vmem, size = 0x9000, scoped, tag = 'internal scratch']
  %s0 = inlined_call_operand.vmem [shape: f32[256,32], index: 0, kind: input, shape index: {}]
  %s1 = inlined_call_operand.vmem [shape: f32[32,128], index: 1, kind: input, shape index: {}]
  %s2 = inlined_call_operand.vmem [shape: f32[1,128], index: 2, kind: input, shape index: {}]
  %s3 = inlined_call_operand.hbm [shape: f32[256,128], index: 3, kind: output, shape index: {}]
  %s4 = sld [smem:[#allocation0]]
  $region45: #{tpu_custom_call.1} parent=0
    _
  %s6 = ssub.s32 1, %s4
  %s7 = scalar_select 0, %s6, %s4
  $region1: #{tpu_custom_call.1} parent=0
    #allocation2 [shape = 'u8[131072]{0}', space=vmem, size = 0x20000, scoped, tag = 'output window, operand 0']
    #allocation3 [shape = 's32[2]{0}', space=sflag, size = 0x8, scoped, tag = 'scoped memory for tpu_custom_call.1']
    %8 = vsyncpa [#allocation3], 0
    %s9 = scalar_lea.sflag [#allocation3], 1
    %10 = vsyncpa %s9, 0
    loop: start=0, step=1, limit=4
    $region2: #{tpu_custom_call.1} parent=1 // loop_pre_header
      _
    $region3: #{tpu_custom_call.1} parent=1 // loop_header
      %s12 = sphi 0, %s16
      %p13 = scmp.ge.s32.totalorder %s12, 4
      %s22 = sphi 0, %s24
      %s25 = sphi 0, %s22
      %s26 = sphi 0, %s25
      %s42 = sphi 0, %s26
      %s46 = sphi 0, %s46
      %s48 = sphi 0, %s46
      %s49 = sphi 0, %s48
      %s63 = sphi 0, %s49
      %s67 = sphi 0, %s67
      %s69 = sphi 0, %s67
      %s70 = sphi 0, %s69
      %s84 = sphi 0, %s70
      %s90 = sphi 0, %s92
      %s93 = sphi 0, %s90
      %s94 = sphi 0, %s93
      %s110 = sphi 0, %s94
    $region4: #{tpu_custom_call.1} parent=1 // loop_header_branch
      %15 = sbr.rel (%p13) target = $region8
    $region5: #{tpu_custom_call.1} parent=1 // loop_body
      %s17 = ssub.s32 %s12, 1
      %s18 = ssub.s32 %s12, 2
      %s19 = sadd.s32 %s12, 1
      %s20 = ssub.s32 %s12, %s19
      %p21 = scmp.eq.s32.totalorder %s20, 0
      %s23 = sadd.s32 %s22, 1
      %s24 = scalar_select %p21, %s22, %s23
      %p27 = pneg %p21
      %p28 = scmp.eq.s32.totalorder %s12, 1
      %p29 = por %p27, %p28
      %p30 = scmp.ne.s32.totalorder %s22, %s25
      %p31 = scmp.eq.s32.totalorder %s12, 0
      %p32 = por %p30, %p31
      %p33 = scmp.ne.s32.totalorder %s22, %s25
      %p34 = scmp.eq.s32.totalorder %s17, 1
      %p35 = por %p33, %p34
      %p36 = scmp.ne.s32.totalorder %s25, %s26
      %p37 = scmp.eq.s32.totalorder %s17, 0
      %p38 = por %p36, %p37
      %p39 = scmp.ne.s32.totalorder %s25, %s26
      %p40 = scmp.eq.s32.totalorder %s18, 1
      %p41 = por %p39, %p40
      %p43 = scmp.ne.s32.totalorder %s26, %s42
      %p44 = scmp.eq.s32.totalorder %s18, 0
      %p45 = por %p43, %p44
      %s47 = sadd.s32 %s46, 1
      %p50 = scmp.eq.s32.totalorder %s12, 1
      %p51 = scmp.ne.s32.totalorder %s46, %s48
      %p52 = scmp.eq.s32.totalorder %s12, 0
      %p53 = por %p51, %p52
      %p54 = scmp.ne.s32.totalorder %s46, %s48
      %p55 = scmp.eq.s32.totalorder %s17, 1
      %p56 = por %p54, %p55
      %p57 = scmp.ne.s32.totalorder %s48, %s49
      %p58 = scmp.eq.s32.totalorder %s17, 0
      %p59 = por %p57, %p58
      %p60 = scmp.ne.s32.totalorder %s48, %s49
      %p61 = scmp.eq.s32.totalorder %s18, 1
      %p62 = por %p60, %p61
      %p64 = scmp.ne.s32.totalorder %s49, %s63
      %p65 = scmp.eq.s32.totalorder %s18, 0
      %p66 = por %p64, %p65
      %s68 = sadd.s32 %s67, 1
      %p71 = scmp.eq.s32.totalorder %s12, 1
      %p72 = scmp.ne.s32.totalorder %s67, %s69
      %p73 = scmp.eq.s32.totalorder %s12, 0
      %p74 = por %p72, %p73
      %p75 = scmp.ne.s32.totalorder %s67, %s69
      %p76 = scmp.eq.s32.totalorder %s17, 1
      %p77 = por %p75, %p76
      %p78 = scmp.ne.s32.totalorder %s69, %s70
      %p79 = scmp.eq.s32.totalorder %s17, 0
      %p80 = por %p78, %p79
      %p81 = scmp.ne.s32.totalorder %s69, %s70
      %p82 = scmp.eq.s32.totalorder %s18, 1
      %p83 = por %p81, %p82
      %p85 = scmp.ne.s32.totalorder %s70, %s84
      %p86 = scmp.eq.s32.totalorder %s18, 0
      %p87 = por %p85, %p86
      %s88 = ssub.s32 %s12, %s19
      %p89 = scmp.eq.s32.totalorder %s88, 0
      %s91 = sadd.s32 %s90, 1
      %s92 = scalar_select %p89, %s90, %s91
      %p95 = pneg %p89
      %p96 = scmp.eq.s32.totalorder %s12, 1
      %p97 = por %p95, %p96
      %p98 = scmp.ne.s32.totalorder %s90, %s93
      %p99 = scmp.eq.s32.totalorder %s12, 0
      %p100 = por %p98, %p99
      %p101 = scmp.ne.s32.totalorder %s90, %s93
      %p102 = scmp.eq.s32.totalorder %s17, 1
      %p103 = por %p101, %p102
      %p104 = scmp.ne.s32.totalorder %s93, %s94
      %p105 = scmp.eq.s32.totalorder %s17, 0
      %p106 = por %p104, %p105
      %p107 = scmp.ne.s32.totalorder %s93, %s94
      %p108 = scmp.eq.s32.totalorder %s18, 1
      %p109 = por %p107, %p108
      %p111 = scmp.ne.s32.totalorder %s94, %s110
      %p112 = scmp.eq.s32.totalorder %s18, 0
      %p113 = por %p111, %p112
      %p114 = scmp.le.s32.totalorder 1, %s12
      %p115 = scmp.lt.s32.totalorder %s12, 3
      %p116 = pnand %p114, %p115
      %p117 = pneg %p116
      // Predicated region
      $region9: #{tpu_custom_call.1} parent=5 // pred_check
        _
      $region10: #{tpu_custom_call.1} parent=5 // pred_check_branch
        %119 = sbr.rel (%p116) target = $region12
      $region11: #{tpu_custom_call.1} parent=5 // pred_region
        %s120 = ssub.s32 %s12, 1
        // Predicated region
        $region13: #{tpu_custom_call.1} parent=11 // pred_check
          %p121 = pneg %p59
        $region14: #{tpu_custom_call.1} parent=11 // pred_check_branch
          %123 = sbr.rel (%p121) target = $region16
        $region15: #{tpu_custom_call.1} parent=11 // pred_region
          _
        $region16: #{tpu_custom_call.1} parent=11 // pred_fallthru
          _
        // Predicated region
        $region17: #{tpu_custom_call.1} parent=11 // pred_check
          %p124 = pneg %p80
        $region18: #{tpu_custom_call.1} parent=11 // pred_check_branch
          %126 = sbr.rel (%p124) target = $region20
        $region19: #{tpu_custom_call.1} parent=11 // pred_region
          _
        $region20: #{tpu_custom_call.1} parent=11 // pred_fallthru
          _
      $region12: #{tpu_custom_call.1} parent=5 // pred_fallthru
        _
      %p127 = scmp.lt.s32.totalorder %s12, 2
      // Predicated region
      $region21: #{tpu_custom_call.1} parent=5 // pred_check
        %p128 = pneg %p127
      $region22: #{tpu_custom_call.1} parent=5 // pred_check_branch
        %130 = sbr.rel (%p128) target = $region24
      $region23: #{tpu_custom_call.1} parent=5 // pred_region
        // Predicated region
        $region25: #{tpu_custom_call.1} parent=23 // pred_check
          %p131 = pneg %p32
        $region26: #{tpu_custom_call.1} parent=23 // pred_check_branch
          %133 = sbr.rel (%p131) target = $region28
        $region27: #{tpu_custom_call.1} parent=23 // pred_region
          %s134 = smul.u32 16, %s12
          %p135 = scmp.lt.s32.totalorder %s134, 31
          %s136 = scalar_select %p135, %s134, 31
          %s137 = smul.addr %s136, 8
          %s138 = scalar_lea.vmem %s0, %s137
          %s139 = smul.u32 16, %s12
        $region28: #{tpu_custom_call.1} parent=23 // pred_fallthru
          _
      $region24: #{tpu_custom_call.1} parent=5 // pred_fallthru
        _
      %p140 = scmp.le.s32.totalorder 1, %s12
      %p141 = scmp.lt.s32.totalorder %s12, 3
      %p142 = pnand %p140, %p141
      %p143 = pneg %p142
      // Predicated region
      $region29: #{tpu_custom_call.1} parent=5 // pred_check
        _
      $region30: #{tpu_custom_call.1} parent=5 // pred_check_branch
        %145 = sbr.rel (%p142) target = $region32
      $region31: #{tpu_custom_call.1} parent=5 // pred_region
        %s146 = ssub.s32 %s12, 1
        %s147 = smul.u32 16, %s17
        %p148 = scmp.lt.s32.totalorder %s147, 31
        %s149 = scalar_select %p148, %s147, 31
        %s150 = smul.addr %s149, 8
        %s151 = scalar_lea.vmem %s0, %s150
        %p152 = pneg %p38
        %p153 = pneg %p35
        %p154 = pneg %p59
        %p155 = pneg %p56
        %p156 = pneg %p80
        %p157 = pneg %p77
        %p158 = pneg %p106
        %p159 = pneg %p103
        %s160 = sand.u32 %s93, 1
        %s161 = scalar_lea.sflag [#allocation3], %s160
        %s162 = sand.u32 %s93, 1
        %s163 = smul.addr %s162, 128
        %s164 = scalar_lea.vmem [#allocation2], %s163
        %s165 = smul.u32 16, %s17
        %p166 = scmp.lt.s32.totalorder %s165, 31
        %s167 = scalar_select %p166, %s165, 31
        %s168 = smul.addr %s167, 8
        %s169 = scalar_lea.vmem %s0, %s168
        %s170 = smul.u32 16, %s17
        %s171 = smul.u32 16, %s17
        %v172 = vld [vmem:[%s169] sm:$0xff]
        %v173 = vld [vmem:[%s169 + $0x8] sm:$0xff]
        %v174 = vld [vmem:[%s169 + $0x10] sm:$0xff]
        %v175 = vld [vmem:[%s169 + $0x18] sm:$0xff]
        %v176 = vld [vmem:[%s169 + $0x20] sm:$0xff]
        %v177 = vld [vmem:[%s169 + $0x28] sm:$0xff]
        %v178 = vld [vmem:[%s169 + $0x30] sm:$0xff]
        %v179 = vld [vmem:[%s169 + $0x38] sm:$0xff]
        %v180 = vld [vmem:[%s169 + $0x40] sm:$0xff]
        %v181 = vld [vmem:[%s169 + $0x48] sm:$0xff]
        %v182 = vld [vmem:[%s169 + $0x50] sm:$0xff]
        %v183 = vld [vmem:[%s169 + $0x58] sm:$0xff]
        %v184 = vld [vmem:[%s169 + $0x60] sm:$0xff]
        %v185 = vld [vmem:[%s169 + $0x68] sm:$0xff]
        %v186 = vld [vmem:[%s169 + $0x70] sm:$0xff]
        %v187 = vld [vmem:[%s169 + $0x78] sm:$0xff]
        %v188 = vld [vmem:[%s1] sm:$0xff]
        %v189 = vld [vmem:[%s1 + $0x8] sm:$0xff]
        %v190 = vld [vmem:[%s1 + $0x10] sm:$0xff]
        %v191 = vld [vmem:[%s1 + $0x18] sm:$0xff]
        %v192 = vld [vmem:[%s2] sm:$0x1]
        %v194 = vperm.slane %v192, 0
        %vm196 = vcmask 261120
        %v198 = vsel %vm196, %v172, 0
        %v201 = vsel %vm196, %v173, 0
        %v204 = vsel %vm196, %v174, 0
        %v207 = vsel %vm196, %v175, 0
        %v210 = vsel %vm196, %v176, 0
        %v213 = vsel %vm196, %v177, 0
        %v216 = vsel %vm196, %v178, 0
        %v219 = vsel %vm196, %v179, 0
        %v222 = vsel %vm196, %v180, 0
        %v225 = vsel %vm196, %v181, 0
        %v228 = vsel %vm196, %v182, 0
        %v231 = vsel %vm196, %v183, 0
        %v234 = vsel %vm196, %v184, 0
        %v237 = vsel %vm196, %v185, 0
        %v240 = vsel %vm196, %v186, 0
        %v243 = vsel %vm196, %v187, 0
        %245 = vmatpush.msra.mxu0 0.0
        %246 = vmatpush.msra.mxu0 0.0
        %247 = vmatpush.msra.mxu0 0.0
        %248 = vmatpush.msra.mxu0 0.0
        %249 = vmatpush.msra.mxu0 0.0
        %250 = vmatpush.msra.mxu0 0.0
        %251 = vmatpush.msra.mxu0 0.0
        %252 = vmatpush.msra.mxu0 0.0
        %253 = vmatpush.msra.mxu0 0.0
        %254 = vmatpush.msra.mxu0 0.0
        %255 = vmatpush.msra.mxu0 0.0
        %256 = vmatpush.msra.mxu0 0.0
        %v257 = vand.u32 %v191, 4294901760
        %258 = vmatpush.msra.mxu0 %v257
        %v259 = vand.u32 %v190, 4294901760
        %260 = vmatpush.msra.mxu0 %v259
        %v261 = vand.u32 %v189, 4294901760
        %262 = vmatpush.msra.mxu0 %v261
        %v263 = vand.u32 %v188, 4294901760
        %264 = vmatpush.msra.mxu0 %v263
        %v265 = vand.u32 %v198, 4294901760
        %v266 = vsub.f32 %v198, %v265
        %v267 = vand.u32 %v266, 4294901760
        %v268 = vsub.f32 %v266, %v267
        %v269 = vand.u32 %v268, 4294901760
        %270 = vmatmul.f32.gmra.mxu0 %v269
        %v271 = vpop.f32.mrf.mxu0
        %v272 = vadd.f32 %v194, %v271
        %v273 = vand.u32 %v201, 4294901760
        %v274 = vsub.f32 %v201, %v273
        %v275 = vand.u32 %v274, 4294901760
        %v276 = vsub.f32 %v274, %v275
        %v277 = vand.u32 %v276, 4294901760
        %278 = vmatmul.f32.gmra.mxu0 %v277
        %v279 = vpop.f32.mrf.mxu0
        %v280 = vadd.f32 %v194, %v279
        %v281 = vand.u32 %v204, 4294901760
        %v282 = vsub.f32 %v204, %v281
        %v283 = vand.u32 %v282, 4294901760
        %v284 = vsub.f32 %v282, %v283
        %v285 = vand.u32 %v284, 4294901760
        %286 = vmatmul.f32.gmra.mxu0 %v285
        %v287 = vpop.f32.mrf.mxu0
        %v288 = vadd.f32 %v194, %v287
        %v289 = vand.u32 %v207, 4294901760
        %v290 = vsub.f32 %v207, %v289
        %v291 = vand.u32 %v290, 4294901760
        %v292 = vsub.f32 %v290, %v291
        %v293 = vand.u32 %v292, 4294901760
        %294 = vmatmul.f32.gmra.mxu0 %v293
        %v295 = vpop.f32.mrf.mxu0
        %v296 = vadd.f32 %v194, %v295
        %v297 = vand.u32 %v210, 4294901760
        %v298 = vsub.f32 %v210, %v297
        %v299 = vand.u32 %v298, 4294901760
        %v300 = vsub.f32 %v298, %v299
        %v301 = vand.u32 %v300, 4294901760
        %302 = vmatmul.f32.gmra.mxu0 %v301
        %v303 = vpop.f32.mrf.mxu0
        %v304 = vadd.f32 %v194, %v303
        %v305 = vand.u32 %v213, 4294901760
        %v306 = vsub.f32 %v213, %v305
        %v307 = vand.u32 %v306, 4294901760
        %v308 = vsub.f32 %v306, %v307
        %v309 = vand.u32 %v308, 4294901760
        %310 = vmatmul.f32.gmra.mxu0 %v309
        %v311 = vpop.f32.mrf.mxu0
        %v312 = vadd.f32 %v194, %v311
        %v313 = vand.u32 %v216, 4294901760
        %v314 = vsub.f32 %v216, %v313
        %v315 = vand.u32 %v314, 4294901760
        %v316 = vsub.f32 %v314, %v315
        %v317 = vand.u32 %v316, 4294901760
        %318 = vmatmul.f32.gmra.mxu0 %v317
        %v319 = vpop.f32.mrf.mxu0
        %v320 = vadd.f32 %v194, %v319
        %v321 = vand.u32 %v219, 4294901760
        %v322 = vsub.f32 %v219, %v321
        %v323 = vand.u32 %v322, 4294901760
        %v324 = vsub.f32 %v322, %v323
        %v325 = vand.u32 %v324, 4294901760
        %326 = vmatmul.f32.gmra.mxu0 %v325
        %v327 = vpop.f32.mrf.mxu0
        %v328 = vadd.f32 %v194, %v327
        %v329 = vand.u32 %v222, 4294901760
        %v330 = vsub.f32 %v222, %v329
        %v331 = vand.u32 %v330, 4294901760
        %v332 = vsub.f32 %v330, %v331
        %v333 = vand.u32 %v332, 4294901760
        %334 = vmatmul.f32.gmra.mxu0 %v333
        %v335 = vpop.f32.mrf.mxu0
        %v336 = vadd.f32 %v194, %v335
        %v337 = vand.u32 %v225, 4294901760
        %v338 = vsub.f32 %v225, %v337
        %v339 = vand.u32 %v338, 4294901760
        %v340 = vsub.f32 %v338, %v339
        %v341 = vand.u32 %v340, 4294901760
        %342 = vmatmul.f32.gmra.mxu0 %v341
        %v343 = vpop.f32.mrf.mxu0
        %v344 = vadd.f32 %v194, %v343
        %v345 = vand.u32 %v228, 4294901760
        %v346 = vsub.f32 %v228, %v345
        %v347 = vand.u32 %v346, 4294901760
        %v348 = vsub.f32 %v346, %v347
        %v349 = vand.u32 %v348, 4294901760
        %350 = vmatmul.f32.gmra.mxu0 %v349
        %v351 = vpop.f32.mrf.mxu0
        %v352 = vadd.f32 %v194, %v351
        %v353 = vand.u32 %v231, 4294901760
        %v354 = vsub.f32 %v231, %v353
        %v355 = vand.u32 %v354, 4294901760
        %v356 = vsub.f32 %v354, %v355
        %v357 = vand.u32 %v356, 4294901760
        %358 = vmatmul.f32.gmra.mxu0 %v357
        %v359 = vpop.f32.mrf.mxu0
        %v360 = vadd.f32 %v194, %v359
        %v361 = vand.u32 %v234, 4294901760
        %v362 = vsub.f32 %v234, %v361
        %v363 = vand.u32 %v362, 4294901760
        %v364 = vsub.f32 %v362, %v363
        %v365 = vand.u32 %v364, 4294901760
        %366 = vmatmul.f32.gmra.mxu0 %v365
        %v367 = vpop.f32.mrf.mxu0
        %v368 = vadd.f32 %v194, %v367
        %v369 = vand.u32 %v237, 4294901760
        %v370 = vsub.f32 %v237, %v369
        %v371 = vand.u32 %v370, 4294901760
        %v372 = vsub.f32 %v370, %v371
        %v373 = vand.u32 %v372, 4294901760
        %374 = vmatmul.f32.gmra.mxu0 %v373
        %v375 = vpop.f32.mrf.mxu0
        %v376 = vadd.f32 %v194, %v375
        %v377 = vand.u32 %v240, 4294901760
        %v378 = vsub.f32 %v240, %v377
        %v379 = vand.u32 %v378, 4294901760
        %v380 = vsub.f32 %v378, %v379
        %v381 = vand.u32 %v380, 4294901760
        %382 = vmatmul.f32.gmra.mxu0 %v381
        %v383 = vpop.f32.mrf.mxu0
        %v384 = vadd.f32 %v194, %v383
        %v385 = vand.u32 %v243, 4294901760
        %v386 = vsub.f32 %v243, %v385
        %v387 = vand.u32 %v386, 4294901760
        %v388 = vsub.f32 %v386, %v387
        %v389 = vand.u32 %v388, 4294901760
        %390 = vmatmul.f32.gmra.mxu0 %v389
        %v391 = vpop.f32.mrf.mxu0
        %v392 = vadd.f32 %v194, %v391
        %393 = vdwg.mxu0
        %394 = vmatpush.msra.mxu0 0.0
        %395 = vmatpush.msra.mxu0 0.0
        %396 = vmatpush.msra.mxu0 0.0
        %397 = vmatpush.msra.mxu0 0.0
        %398 = vmatpush.msra.mxu0 0.0
        %399 = vmatpush.msra.mxu0 0.0
        %400 = vmatpush.msra.mxu0 0.0
        %401 = vmatpush.msra.mxu0 0.0
        %402 = vmatpush.msra.mxu0 0.0
        %403 = vmatpush.msra.mxu0 0.0
        %404 = vmatpush.msra.mxu0 0.0
        %405 = vmatpush.msra.mxu0 0.0
        %v406 = vand.u32 %v191, 4294901760
        %v407 = vsub.f32 %v191, %v406
        %v408 = vand.u32 %v407, 4294901760
        %v409 = vsub.f32 %v407, %v408
        %v410 = vand.u32 %v409, 4294901760
        %411 = vmatpush.msra.mxu0 %v410
        %v412 = vand.u32 %v190, 4294901760
        %v413 = vsub.f32 %v190, %v412
        %v414 = vand.u32 %v413, 4294901760
        %v415 = vsub.f32 %v413, %v414
        %v416 = vand.u32 %v415, 4294901760
        %417 = vmatpush.msra.mxu0 %v416
        %v418 = vand.u32 %v189, 4294901760
        %v419 = vsub.f32 %v189, %v418
        %v420 = vand.u32 %v419, 4294901760
        %v421 = vsub.f32 %v419, %v420
        %v422 = vand.u32 %v421, 4294901760
        %423 = vmatpush.msra.mxu0 %v422
        %v424 = vand.u32 %v188, 4294901760
        %v425 = vsub.f32 %v188, %v424
        %v426 = vand.u32 %v425, 4294901760
        %v427 = vsub.f32 %v425, %v426
        %v428 = vand.u32 %v427, 4294901760
        %429 = vmatpush.msra.mxu0 %v428
        %v430 = vand.u32 %v198, 4294901760
        %431 = vmatmul.f32.gmra.mxu0 %v430
        %v432 = vpop.f32.mrf.mxu0
        %v433 = vadd.f32 %v272, %v432
        %v434 = vand.u32 %v201, 4294901760
        %435 = vmatmul.f32.gmra.mxu0 %v434
        %v436 = vpop.f32.mrf.mxu0
        %v437 = vadd.f32 %v280, %v436
        %v438 = vand.u32 %v204, 4294901760
        %439 = vmatmul.f32.gmra.mxu0 %v438
        %v440 = vpop.f32.mrf.mxu0
        %v441 = vadd.f32 %v288, %v440
        %v442 = vand.u32 %v207, 4294901760
        %443 = vmatmul.f32.gmra.mxu0 %v442
        %v444 = vpop.f32.mrf.mxu0
        %v445 = vadd.f32 %v296, %v444
        %v446 = vand.u32 %v210, 4294901760
        %447 = vmatmul.f32.gmra.mxu0 %v446
        %v448 = vpop.f32.mrf.mxu0
        %v449 = vadd.f32 %v304, %v448
        %v450 = vand.u32 %v213, 4294901760
        %451 = vmatmul.f32.gmra.mxu0 %v450
        %v452 = vpop.f32.mrf.mxu0
        %v453 = vadd.f32 %v312, %v452
        %v454 = vand.u32 %v216, 4294901760
        %455 = vmatmul.f32.gmra.mxu0 %v454
        %v456 = vpop.f32.mrf.mxu0
        %v457 = vadd.f32 %v320, %v456
        %v458 = vand.u32 %v219, 4294901760
        %459 = vmatmul.f32.gmra.mxu0 %v458
        %v460 = vpop.f32.mrf.mxu0
        %v461 = vadd.f32 %v328, %v460
        %v462 = vand.u32 %v222, 4294901760
        %463 = vmatmul.f32.gmra.mxu0 %v462
        %v464 = vpop.f32.mrf.mxu0
        %v465 = vadd.f32 %v336, %v464
        %v466 = vand.u32 %v225, 4294901760
        %467 = vmatmul.f32.gmra.mxu0 %v466
        %v468 = vpop.f32.mrf.mxu0
        %v469 = vadd.f32 %v344, %v468
        %v470 = vand.u32 %v228, 4294901760
        %471 = vmatmul.f32.gmra.mxu0 %v470
        %v472 = vpop.f32.mrf.mxu0
        %v473 = vadd.f32 %v352, %v472
        %v474 = vand.u32 %v231, 4294901760
        %475 = vmatmul.f32.gmra.mxu0 %v474
        %v476 = vpop.f32.mrf.mxu0
        %v477 = vadd.f32 %v360, %v476
        %v478 = vand.u32 %v234, 4294901760
        %479 = vmatmul.f32.gmra.mxu0 %v478
        %v480 = vpop.f32.mrf.mxu0
        %v481 = vadd.f32 %v368, %v480
        %v482 = vand.u32 %v237, 4294901760
        %483 = vmatmul.f32.gmra.mxu0 %v482
        %v484 = vpop.f32.mrf.mxu0
        %v485 = vadd.f32 %v376, %v484
        %v486 = vand.u32 %v240, 4294901760
        %487 = vmatmul.f32.gmra.mxu0 %v486
        %v488 = vpop.f32.mrf.mxu0
        %v489 = vadd.f32 %v384, %v488
        %v490 = vand.u32 %v243, 4294901760
        %491 = vmatmul.f32.gmra.mxu0 %v490
        %v492 = vpop.f32.mrf.mxu0
        %v493 = vadd.f32 %v392, %v492
        %494 = vdwg.mxu0
        %495 = vmatpush.msra.mxu0 0.0
        %496 = vmatpush.msra.mxu0 0.0
        %497 = vmatpush.msra.mxu0 0.0
        %498 = vmatpush.msra.mxu0 0.0
        %499 = vmatpush.msra.mxu0 0.0
        %500 = vmatpush.msra.mxu0 0.0
        %501 = vmatpush.msra.mxu0 0.0
        %502 = vmatpush.msra.mxu0 0.0
        %503 = vmatpush.msra.mxu0 0.0
        %504 = vmatpush.msra.mxu0 0.0
        %505 = vmatpush.msra.mxu0 0.0
        %506 = vmatpush.msra.mxu0 0.0
        %v507 = vand.u32 %v191, 4294901760
        %v508 = vsub.f32 %v191, %v507
        %509 = vmatpush.msra.mxu0 %v508
        %v510 = vand.u32 %v190, 4294901760
        %v511 = vsub.f32 %v190, %v510
        %512 = vmatpush.msra.mxu0 %v511
        %v513 = vand.u32 %v189, 4294901760
        %v514 = vsub.f32 %v189, %v513
        %515 = vmatpush.msra.mxu0 %v514
        %v516 = vand.u32 %v188, 4294901760
        %v517 = vsub.f32 %v188, %v516
        %518 = vmatpush.msra.mxu0 %v517
        %v519 = vand.u32 %v198, 4294901760
        %v520 = vsub.f32 %v198, %v519
        %521 = vmatmul.f32.gmra.mxu0 %v520
        %v522 = vpop.f32.mrf.mxu0
        %v523 = vadd.f32 %v433, %v522
        %v524 = vand.u32 %v201, 4294901760
        %v525 = vsub.f32 %v201, %v524
        %526 = vmatmul.f32.gmra.mxu0 %v525
        %v527 = vpop.f32.mrf.mxu0
        %v528 = vadd.f32 %v437, %v527
        %v529 = vand.u32 %v204, 4294901760
        %v530 = vsub.f32 %v204, %v529
        %531 = vmatmul.f32.gmra.mxu0 %v530
        %v532 = vpop.f32.mrf.mxu0
        %v533 = vadd.f32 %v441, %v532
        %v534 = vand.u32 %v207, 4294901760
        %v535 = vsub.f32 %v207, %v534
        %536 = vmatmul.f32.gmra.mxu0 %v535
        %v537 = vpop.f32.mrf.mxu0
        %v538 = vadd.f32 %v445, %v537
        %v539 = vand.u32 %v210, 4294901760
        %v540 = vsub.f32 %v210, %v539
        %541 = vmatmul.f32.gmra.mxu0 %v540
        %v542 = vpop.f32.mrf.mxu0
        %v543 = vadd.f32 %v449, %v542
        %v544 = vand.u32 %v213, 4294901760
        %v545 = vsub.f32 %v213, %v544
        %546 = vmatmul.f32.gmra.mxu0 %v545
        %v547 = vpop.f32.mrf.mxu0
        %v548 = vadd.f32 %v453, %v547
        %v549 = vand.u32 %v216, 4294901760
        %v550 = vsub.f32 %v216, %v549
        %551 = vmatmul.f32.gmra.mxu0 %v550
        %v552 = vpop.f32.mrf.mxu0
        %v553 = vadd.f32 %v457, %v552
        %v554 = vand.u32 %v219, 4294901760
        %v555 = vsub.f32 %v219, %v554
        %556 = vmatmul.f32.gmra.mxu0 %v555
        %v557 = vpop.f32.mrf.mxu0
        %v558 = vadd.f32 %v461, %v557
        %v559 = vand.u32 %v222, 4294901760
        %v560 = vsub.f32 %v222, %v559
        %561 = vmatmul.f32.gmra.mxu0 %v560
        %v562 = vpop.f32.mrf.mxu0
        %v563 = vadd.f32 %v465, %v562
        %v564 = vand.u32 %v225, 4294901760
        %v565 = vsub.f32 %v225, %v564
        %566 = vmatmul.f32.gmra.mxu0 %v565
        %v567 = vpop.f32.mrf.mxu0
        %v568 = vadd.f32 %v469, %v567
        %v569 = vand.u32 %v228, 4294901760
        %v570 = vsub.f32 %v228, %v569
        %571 = vmatmul.f32.gmra.mxu0 %v570
        %v572 = vpop.f32.mrf.mxu0
        %v573 = vadd.f32 %v473, %v572
        %v574 = vand.u32 %v231, 4294901760
        %v575 = vsub.f32 %v231, %v574
        %576 = vmatmul.f32.gmra.mxu0 %v575
        %v577 = vpop.f32.mrf.mxu0
        %v578 = vadd.f32 %v477, %v577
        %v579 = vand.u32 %v234, 4294901760
        %v580 = vsub.f32 %v234, %v579
        %581 = vmatmul.f32.gmra.mxu0 %v580
        %v582 = vpop.f32.mrf.mxu0
        %v583 = vadd.f32 %v481, %v582
        %v584 = vand.u32 %v237, 4294901760
        %v585 = vsub.f32 %v237, %v584
        %586 = vmatmul.f32.gmra.mxu0 %v585
        %v587 = vpop.f32.mrf.mxu0
        %v588 = vadd.f32 %v485, %v587
        %v589 = vand.u32 %v240, 4294901760
        %v590 = vsub.f32 %v240, %v589
        %591 = vmatmul.f32.gmra.mxu0 %v590
        %v592 = vpop.f32.mrf.mxu0
        %v593 = vadd.f32 %v489, %v592
        %v594 = vand.u32 %v243, 4294901760
        %v595 = vsub.f32 %v243, %v594
        %596 = vmatmul.f32.gmra.mxu0 %v595
        %v597 = vpop.f32.mrf.mxu0
        %v598 = vadd.f32 %v493, %v597
        %599 = vdwg.mxu0
        %600 = vmatpush.msra.mxu0 0.0
        %601 = vmatpush.msra.mxu0 0.0
        %602 = vmatpush.msra.mxu0 0.0
        %603 = vmatpush.msra.mxu0 0.0
        %604 = vmatpush.msra.mxu0 0.0
        %605 = vmatpush.msra.mxu0 0.0
        %606 = vmatpush.msra.mxu0 0.0
        %607 = vmatpush.msra.mxu0 0.0
        %608 = vmatpush.msra.mxu0 0.0
        %609 = vmatpush.msra.mxu0 0.0
        %610 = vmatpush.msra.mxu0 0.0
        %611 = vmatpush.msra.mxu0 0.0
        %v612 = vand.u32 %v191, 4294901760
        %613 = vmatpush.msra.mxu0 %v612
        %v614 = vand.u32 %v190, 4294901760
        %615 = vmatpush.msra.mxu0 %v614
        %v616 = vand.u32 %v189, 4294901760
        %617 = vmatpush.msra.mxu0 %v616
        %v618 = vand.u32 %v188, 4294901760
        %619 = vmatpush.msra.mxu0 %v618
        %v620 = vand.u32 %v198, 4294901760
        %v621 = vsub.f32 %v198, %v620
        %v622 = vand.u32 %v621, 4294901760
        %623 = vmatmul.f32.gmra.mxu0 %v622
        %v624 = vpop.f32.mrf.mxu0
        %v625 = vadd.f32 %v523, %v624
        %v626 = vand.u32 %v201, 4294901760
        %v627 = vsub.f32 %v201, %v626
        %v628 = vand.u32 %v627, 4294901760
        %629 = vmatmul.f32.gmra.mxu0 %v628
        %v630 = vpop.f32.mrf.mxu0
        %v631 = vadd.f32 %v528, %v630
        %v632 = vand.u32 %v204, 4294901760
        %v633 = vsub.f32 %v204, %v632
        %v634 = vand.u32 %v633, 4294901760
        %635 = vmatmul.f32.gmra.mxu0 %v634
        %v636 = vpop.f32.mrf.mxu0
        %v637 = vadd.f32 %v533, %v636
        %v638 = vand.u32 %v207, 4294901760
        %v639 = vsub.f32 %v207, %v638
        %v640 = vand.u32 %v639, 4294901760
        %641 = vmatmul.f32.gmra.mxu0 %v640
        %v642 = vpop.f32.mrf.mxu0
        %v643 = vadd.f32 %v538, %v642
        %v644 = vand.u32 %v210, 4294901760
        %v645 = vsub.f32 %v210, %v644
        %v646 = vand.u32 %v645, 4294901760
        %647 = vmatmul.f32.gmra.mxu0 %v646
        %v648 = vpop.f32.mrf.mxu0
        %v649 = vadd.f32 %v543, %v648
        %v650 = vand.u32 %v213, 4294901760
        %v651 = vsub.f32 %v213, %v650
        %v652 = vand.u32 %v651, 4294901760
        %653 = vmatmul.f32.gmra.mxu0 %v652
        %v654 = vpop.f32.mrf.mxu0
        %v655 = vadd.f32 %v548, %v654
        %v656 = vand.u32 %v216, 4294901760
        %v657 = vsub.f32 %v216, %v656
        %v658 = vand.u32 %v657, 4294901760
        %659 = vmatmul.f32.gmra.mxu0 %v658
        %v660 = vpop.f32.mrf.mxu0
        %v661 = vadd.f32 %v553, %v660
        %v662 = vand.u32 %v219, 4294901760
        %v663 = vsub.f32 %v219, %v662
        %v664 = vand.u32 %v663, 4294901760
        %665 = vmatmul.f32.gmra.mxu0 %v664
        %v666 = vpop.f32.mrf.mxu0
        %v667 = vadd.f32 %v558, %v666
        %v668 = vand.u32 %v222, 4294901760
        %v669 = vsub.f32 %v222, %v668
        %v670 = vand.u32 %v669, 4294901760
        %671 = vmatmul.f32.gmra.mxu0 %v670
        %v672 = vpop.f32.mrf.mxu0
        %v673 = vadd.f32 %v563, %v672
        %v674 = vand.u32 %v225, 4294901760
        %v675 = vsub.f32 %v225, %v674
        %v676 = vand.u32 %v675, 4294901760
        %677 = vmatmul.f32.gmra.mxu0 %v676
        %v678 = vpop.f32.mrf.mxu0
        %v679 = vadd.f32 %v568, %v678
        %v680 = vand.u32 %v228, 4294901760
        %v681 = vsub.f32 %v228, %v680
        %v682 = vand.u32 %v681, 4294901760
        %683 = vmatmul.f32.gmra.mxu0 %v682
        %v684 = vpop.f32.mrf.mxu0
        %v685 = vadd.f32 %v573, %v684
        %v686 = vand.u32 %v231, 4294901760
        %v687 = vsub.f32 %v231, %v686
        %v688 = vand.u32 %v687, 4294901760
        %689 = vmatmul.f32.gmra.mxu0 %v688
        %v690 = vpop.f32.mrf.mxu0
        %v691 = vadd.f32 %v578, %v690
        %v692 = vand.u32 %v234, 4294901760
        %v693 = vsub.f32 %v234, %v692
        %v694 = vand.u32 %v693, 4294901760
        %695 = vmatmul.f32.gmra.mxu0 %v694
        %v696 = vpop.f32.mrf.mxu0
        %v697 = vadd.f32 %v583, %v696
        %v698 = vand.u32 %v237, 4294901760
        %v699 = vsub.f32 %v237, %v698
        %v700 = vand.u32 %v699, 4294901760
        %701 = vmatmul.f32.gmra.mxu0 %v700
        %v702 = vpop.f32.mrf.mxu0
        %v703 = vadd.f32 %v588, %v702
        %v704 = vand.u32 %v240, 4294901760
        %v705 = vsub.f32 %v240, %v704
        %v706 = vand.u32 %v705, 4294901760
        %707 = vmatmul.f32.gmra.mxu0 %v706
        %v708 = vpop.f32.mrf.mxu0
        %v709 = vadd.f32 %v593, %v708
        %v710 = vand.u32 %v243, 4294901760
        %v711 = vsub.f32 %v243, %v710
        %v712 = vand.u32 %v711, 4294901760
        %713 = vmatmul.f32.gmra.mxu0 %v712
        %v714 = vpop.f32.mrf.mxu0
        %v715 = vadd.f32 %v598, %v714
        %716 = vdwg.mxu0
        %717 = vmatpush.msra.mxu0 0.0
        %718 = vmatpush.msra.mxu0 0.0
        %719 = vmatpush.msra.mxu0 0.0
        %720 = vmatpush.msra.mxu0 0.0
        %721 = vmatpush.msra.mxu0 0.0
        %722 = vmatpush.msra.mxu0 0.0
        %723 = vmatpush.msra.mxu0 0.0
        %724 = vmatpush.msra.mxu0 0.0
        %725 = vmatpush.msra.mxu0 0.0
        %726 = vmatpush.msra.mxu0 0.0
        %727 = vmatpush.msra.mxu0 0.0
        %728 = vmatpush.msra.mxu0 0.0
        %v729 = vand.u32 %v191, 4294901760
        %v730 = vsub.f32 %v191, %v729
        %v731 = vand.u32 %v730, 4294901760
        %732 = vmatpush.msra.mxu0 %v731
        %v733 = vand.u32 %v190, 4294901760
        %v734 = vsub.f32 %v190, %v733
        %v735 = vand.u32 %v734, 4294901760
        %736 = vmatpush.msra.mxu0 %v735
        %v737 = vand.u32 %v189, 4294901760
        %v738 = vsub.f32 %v189, %v737
        %v739 = vand.u32 %v738, 4294901760
        %740 = vmatpush.msra.mxu0 %v739
        %v741 = vand.u32 %v188, 4294901760
        %v742 = vsub.f32 %v188, %v741
        %v743 = vand.u32 %v742, 4294901760
        %744 = vmatpush.msra.mxu0 %v743
        %v745 = vand.u32 %v198, 4294901760
        %746 = vmatmul.f32.gmra.mxu0 %v745
        %v747 = vpop.f32.mrf.mxu0
        %v748 = vadd.f32 %v625, %v747
        %v749 = vand.u32 %v201, 4294901760
        %750 = vmatmul.f32.gmra.mxu0 %v749
        %v751 = vpop.f32.mrf.mxu0
        %v752 = vadd.f32 %v631, %v751
        %v753 = vand.u32 %v204, 4294901760
        %754 = vmatmul.f32.gmra.mxu0 %v753
        %v755 = vpop.f32.mrf.mxu0
        %v756 = vadd.f32 %v637, %v755
        %v757 = vand.u32 %v207, 4294901760
        %758 = vmatmul.f32.gmra.mxu0 %v757
        %v759 = vpop.f32.mrf.mxu0
        %v760 = vadd.f32 %v643, %v759
        %v761 = vand.u32 %v210, 4294901760
        %762 = vmatmul.f32.gmra.mxu0 %v761
        %v763 = vpop.f32.mrf.mxu0
        %v764 = vadd.f32 %v649, %v763
        %v765 = vand.u32 %v213, 4294901760
        %766 = vmatmul.f32.gmra.mxu0 %v765
        %v767 = vpop.f32.mrf.mxu0
        %v768 = vadd.f32 %v655, %v767
        %v769 = vand.u32 %v216, 4294901760
        %770 = vmatmul.f32.gmra.mxu0 %v769
        %v771 = vpop.f32.mrf.mxu0
        %v772 = vadd.f32 %v661, %v771
        %v773 = vand.u32 %v219, 4294901760
        %774 = vmatmul.f32.gmra.mxu0 %v773
        %v775 = vpop.f32.mrf.mxu0
        %v776 = vadd.f32 %v667, %v775
        %v777 = vand.u32 %v222, 4294901760
        %778 = vmatmul.f32.gmra.mxu0 %v777
        %v779 = vpop.f32.mrf.mxu0
        %v780 = vadd.f32 %v673, %v779
        %v781 = vand.u32 %v225, 4294901760
        %782 = vmatmul.f32.gmra.mxu0 %v781
        %v783 = vpop.f32.mrf.mxu0
        %v784 = vadd.f32 %v679, %v783
        %v785 = vand.u32 %v228, 4294901760
        %786 = vmatmul.f32.gmra.mxu0 %v785
        %v787 = vpop.f32.mrf.mxu0
        %v788 = vadd.f32 %v685, %v787
        %v789 = vand.u32 %v231, 4294901760
        %790 = vmatmul.f32.gmra.mxu0 %v789
        %v791 = vpop.f32.mrf.mxu0
        %v792 = vadd.f32 %v691, %v791
        %v793 = vand.u32 %v234, 4294901760
        %794 = vmatmul.f32.gmra.mxu0 %v793
        %v795 = vpop.f32.mrf.mxu0
        %v796 = vadd.f32 %v697, %v795
        %v797 = vand.u32 %v237, 4294901760
        %798 = vmatmul.f32.gmra.mxu0 %v797
        %v799 = vpop.f32.mrf.mxu0
        %v800 = vadd.f32 %v703, %v799
        %v801 = vand.u32 %v240, 4294901760
        %802 = vmatmul.f32.gmra.mxu0 %v801
        %v803 = vpop.f32.mrf.mxu0
        %v804 = vadd.f32 %v709, %v803
        %v805 = vand.u32 %v243, 4294901760
        %806 = vmatmul.f32.gmra.mxu0 %v805
        %v807 = vpop.f32.mrf.mxu0
        %v808 = vadd.f32 %v715, %v807
        %809 = vdwg.mxu0
        %810 = vmatpush.msra.mxu0 0.0
        %811 = vmatpush.msra.mxu0 0.0
        %812 = vmatpush.msra.mxu0 0.0
        %813 = vmatpush.msra.mxu0 0.0
        %814 = vmatpush.msra.mxu0 0.0
        %815 = vmatpush.msra.mxu0 0.0
        %816 = vmatpush.msra.mxu0 0.0
        %817 = vmatpush.msra.mxu0 0.0
        %818 = vmatpush.msra.mxu0 0.0
        %819 = vmatpush.msra.mxu0 0.0
        %820 = vmatpush.msra.mxu0 0.0
        %821 = vmatpush.msra.mxu0 0.0
        %v822 = vand.u32 %v191, 4294901760
        %823 = vmatpush.msra.mxu0 %v822
        %v824 = vand.u32 %v190, 4294901760
        %825 = vmatpush.msra.mxu0 %v824
        %v826 = vand.u32 %v189, 4294901760
        %827 = vmatpush.msra.mxu0 %v826
        %v828 = vand.u32 %v188, 4294901760
        %829 = vmatpush.msra.mxu0 %v828
        %v830 = vand.u32 %v198, 4294901760
        %831 = vmatmul.f32.gmra.mxu0 %v830
        %v832 = vpop.f32.mrf.mxu0
        %v833 = vadd.f32 %v748, %v832
        %v834 = vand.u32 %v201, 4294901760
        %835 = vmatmul.f32.gmra.mxu0 %v834
        %v836 = vpop.f32.mrf.mxu0
        %v837 = vadd.f32 %v752, %v836
        %v838 = vand.u32 %v204, 4294901760
        %839 = vmatmul.f32.gmra.mxu0 %v838
        %v840 = vpop.f32.mrf.mxu0
        %v841 = vadd.f32 %v756, %v840
        %v842 = vand.u32 %v207, 4294901760
        %843 = vmatmul.f32.gmra.mxu0 %v842
        %v844 = vpop.f32.mrf.mxu0
        %v845 = vadd.f32 %v760, %v844
        %v846 = vand.u32 %v210, 4294901760
        %847 = vmatmul.f32.gmra.mxu0 %v846
        %v848 = vpop.f32.mrf.mxu0
        %v849 = vadd.f32 %v764, %v848
        %v850 = vand.u32 %v213, 4294901760
        %851 = vmatmul.f32.gmra.mxu0 %v850
        %v852 = vpop.f32.mrf.mxu0
        %v853 = vadd.f32 %v768, %v852
        %v854 = vand.u32 %v216, 4294901760
        %855 = vmatmul.f32.gmra.mxu0 %v854
        %v856 = vpop.f32.mrf.mxu0
        %v857 = vadd.f32 %v772, %v856
        %v858 = vand.u32 %v219, 4294901760
        %859 = vmatmul.f32.gmra.mxu0 %v858
        %v860 = vpop.f32.mrf.mxu0
        %v861 = vadd.f32 %v776, %v860
        %v862 = vand.u32 %v222, 4294901760
        %863 = vmatmul.f32.gmra.mxu0 %v862
        %v864 = vpop.f32.mrf.mxu0
        %v865 = vadd.f32 %v780, %v864
        %v866 = vand.u32 %v225, 4294901760
        %867 = vmatmul.f32.gmra.mxu0 %v866
        %v868 = vpop.f32.mrf.mxu0
        %v869 = vadd.f32 %v784, %v868
        %v870 = vand.u32 %v228, 4294901760
        %871 = vmatmul.f32.gmra.mxu0 %v870
        %v872 = vpop.f32.mrf.mxu0
        %v873 = vadd.f32 %v788, %v872
        %v874 = vand.u32 %v231, 4294901760
        %875 = vmatmul.f32.gmra.mxu0 %v874
        %v876 = vpop.f32.mrf.mxu0
        %v877 = vadd.f32 %v792, %v876
        %v878 = vand.u32 %v234, 4294901760
        %879 = vmatmul.f32.gmra.mxu0 %v878
        %v880 = vpop.f32.mrf.mxu0
        %v881 = vadd.f32 %v796, %v880
        %v882 = vand.u32 %v237, 4294901760
        %883 = vmatmul.f32.gmra.mxu0 %v882
        %v884 = vpop.f32.mrf.mxu0
        %v885 = vadd.f32 %v800, %v884
        %v886 = vand.u32 %v240, 4294901760
        %887 = vmatmul.f32.gmra.mxu0 %v886
        %v888 = vpop.f32.mrf.mxu0
        %v889 = vadd.f32 %v804, %v888
        %v890 = vand.u32 %v243, 4294901760
        %891 = vmatmul.f32.gmra.mxu0 %v890
        %v892 = vpop.f32.mrf.mxu0
        %v893 = vadd.f32 %v808, %v892
        %894 = vdwg.mxu0
        %v895 = vlaneseq
        %v896 = vand.u32 %v895, 127
        %v897 = vmax.f32 %v833, 0.0
        %v898 = vmax.f32 %v837, 0.0
        %v899 = vmax.f32 %v841, 0.0
        %v900 = vmax.f32 %v845, 0.0
        %v901 = vmax.f32 %v849, 0.0
        %v902 = vmax.f32 %v853, 0.0
        %v903 = vmax.f32 %v857, 0.0
        %v904 = vmax.f32 %v861, 0.0
        %v905 = vmax.f32 %v865, 0.0
        %v906 = vmax.f32 %v869, 0.0
        %v907 = vmax.f32 %v873, 0.0
        %v908 = vmax.f32 %v877, 0.0
        %v909 = vmax.f32 %v881, 0.0
        %v910 = vmax.f32 %v885, 0.0
        %v911 = vmax.f32 %v889, 0.0
        %v912 = vmax.f32 %v893, 0.0
        %vm913 = vcmp.ne.f32.partialorder %v833, %v833
        %vm914 = vcmp.ne.f32.partialorder %v837, %v837
        %vm915 = vcmp.ne.f32.partialorder %v841, %v841
        %vm916 = vcmp.ne.f32.partialorder %v845, %v845
        %vm917 = vcmp.ne.f32.partialorder %v849, %v849
        %vm918 = vcmp.ne.f32.partialorder %v853, %v853
        %vm919 = vcmp.ne.f32.partialorder %v857, %v857
        %vm920 = vcmp.ne.f32.partialorder %v861, %v861
        %vm921 = vcmp.ne.f32.partialorder %v865, %v865
        %vm922 = vcmp.ne.f32.partialorder %v869, %v869
        %vm923 = vcmp.ne.f32.partialorder %v873, %v873
        %vm924 = vcmp.ne.f32.partialorder %v877, %v877
        %vm925 = vcmp.ne.f32.partialorder %v881, %v881
        %vm926 = vcmp.ne.f32.partialorder %v885, %v885
        %vm927 = vcmp.ne.f32.partialorder %v889, %v889
        %vm928 = vcmp.ne.f32.partialorder %v893, %v893
        %v929 = vadd.f32 %v833, 0.0
        %v930 = vadd.f32 %v837, 0.0
        %v931 = vadd.f32 %v841, 0.0
        %v932 = vadd.f32 %v845, 0.0
        %v933 = vadd.f32 %v849, 0.0
        %v934 = vadd.f32 %v853, 0.0
        %v935 = vadd.f32 %v857, 0.0
        %v936 = vadd.f32 %v861, 0.0
        %v937 = vadd.f32 %v865, 0.0
        %v938 = vadd.f32 %v869, 0.0
        %v939 = vadd.f32 %v873, 0.0
        %v940 = vadd.f32 %v877, 0.0
        %v941 = vadd.f32 %v881, 0.0
        %v942 = vadd.f32 %v885, 0.0
        %v943 = vadd.f32 %v889, 0.0
        %v944 = vadd.f32 %v893, 0.0
        %v945 = vand.u32 2147483647, %v833
        %v946 = vand.u32 2147483647, %v837
        %v947 = vand.u32 2147483647, %v841
        %v948 = vand.u32 2147483647, %v845
        %v949 = vand.u32 2147483647, %v849
        %v950 = vand.u32 2147483647, %v853
        %v951 = vand.u32 2147483647, %v857
        %v952 = vand.u32 2147483647, %v861
        %v953 = vand.u32 2147483647, %v865
        %v954 = vand.u32 2147483647, %v869
        %v955 = vand.u32 2147483647, %v873
        %v956 = vand.u32 2147483647, %v877
        %v957 = vand.u32 2147483647, %v881
        %v958 = vand.u32 2147483647, %v885
        %v959 = vand.u32 2147483647, %v889
        %v960 = vand.u32 2147483647, %v893
        %v961 = vsub.f32 0.0, %v945
        %v962 = vsub.f32 0.0, %v946
        %v963 = vsub.f32 0.0, %v947
        %v964 = vsub.f32 0.0, %v948
        %v965 = vsub.f32 0.0, %v949
        %v966 = vsub.f32 0.0, %v950
        %v967 = vsub.f32 0.0, %v951
        %v968 = vsub.f32 0.0, %v952
        %v969 = vsub.f32 0.0, %v953
        %v970 = vsub.f32 0.0, %v954
        %v971 = vsub.f32 0.0, %v955
        %v972 = vsub.f32 0.0, %v956
        %v973 = vsub.f32 0.0, %v957
        %v974 = vsub.f32 0.0, %v958
        %v975 = vsub.f32 0.0, %v959
        %v976 = vsub.f32 0.0, %v960
        %v977 = vmul.f32 %v961, 1.442695
        %v978 = vpow.pop %v977
        %v979 = vmul.f32 %v962, 1.442695
        %v980 = vpow.pop %v979
        %v981 = vmul.f32 %v963, 1.442695
        %v982 = vpow.pop %v981
        %v983 = vmul.f32 %v964, 1.442695
        %v984 = vpow.pop %v983
        %v985 = vmul.f32 %v965, 1.442695
        %v986 = vpow.pop %v985
        %v987 = vmul.f32 %v966, 1.442695
        %v988 = vpow.pop %v987
        %v989 = vmul.f32 %v967, 1.442695
        %v990 = vpow.pop %v989
        %v991 = vmul.f32 %v968, 1.442695
        %v992 = vpow.pop %v991
        %v993 = vmul.f32 %v969, 1.442695
        %v994 = vpow.pop %v993
        %v995 = vmul.f32 %v970, 1.442695
        %v996 = vpow.pop %v995
        %v997 = vmul.f32 %v971, 1.442695
        %v998 = vpow.pop %v997
        %v999 = vmul.f32 %v972, 1.442695
        %v1000 = vpow.pop %v999
        %v1001 = vmul.f32 %v973, 1.442695
        %v1002 = vpow.pop %v1001
        %v1003 = vmul.f32 %v974, 1.442695
        %v1004 = vpow.pop %v1003
        %v1005 = vmul.f32 %v975, 1.442695
        %v1006 = vpow.pop %v1005
        %v1007 = vmul.f32 %v976, 1.442695
        %v1008 = vpow.pop %v1007
        %v1009 = vadd.f32 %v978, 1.0
        %v1010 = vlog2.pop %v1009
        %v1011 = vmul.f32 %v1010, 0.6931472
        %v1012 = vmul.f32 -0.5, %v978
        %v1013 = vadd.f32 %v1012, 1.0
        %v1014 = vmul.f32 %v1013, %v978
        %v1015 = vand.u32 2147483647, %v978
        %vm1016 = vcmp.lt.f32.partialorder %v1015, 0.0004427343
        %v1017 = vsel %vm1016, %v1014, %v1011
        %v1018 = vadd.f32 %v980, 1.0
        %v1019 = vlog2.pop %v1018
        %v1020 = vmul.f32 %v1019, 0.6931472
        %v1021 = vmul.f32 -0.5, %v980
        %v1022 = vadd.f32 %v1021, 1.0
        %v1023 = vmul.f32 %v1022, %v980
        %v1024 = vand.u32 2147483647, %v980
        %vm1025 = vcmp.lt.f32.partialorder %v1024, 0.0004427343
        %v1026 = vsel %vm1025, %v1023, %v1020
        %v1027 = vadd.f32 %v982, 1.0
        %v1028 = vlog2.pop %v1027
        %v1029 = vmul.f32 %v1028, 0.6931472
        %v1030 = vmul.f32 -0.5, %v982
        %v1031 = vadd.f32 %v1030, 1.0
        %v1032 = vmul.f32 %v1031, %v982
        %v1033 = vand.u32 2147483647, %v982
        %vm1034 = vcmp.lt.f32.partialorder %v1033, 0.0004427343
        %v1035 = vsel %vm1034, %v1032, %v1029
        %v1036 = vadd.f32 %v984, 1.0
        %v1037 = vlog2.pop %v1036
        %v1038 = vmul.f32 %v1037, 0.6931472
        %v1039 = vmul.f32 -0.5, %v984
        %v1040 = vadd.f32 %v1039, 1.0
        %v1041 = vmul.f32 %v1040, %v984
        %v1042 = vand.u32 2147483647, %v984
        %vm1043 = vcmp.lt.f32.partialorder %v1042, 0.0004427343
        %v1044 = vsel %vm1043, %v1041, %v1038
        %v1045 = vadd.f32 %v986, 1.0
        %v1046 = vlog2.pop %v1045
        %v1047 = vmul.f32 %v1046, 0.6931472
        %v1048 = vmul.f32 -0.5, %v986
        %v1049 = vadd.f32 %v1048, 1.0
        %v1050 = vmul.f32 %v1049, %v986
        %v1051 = vand.u32 2147483647, %v986
        %vm1052 = vcmp.lt.f32.partialorder %v1051, 0.0004427343
        %v1053 = vsel %vm1052, %v1050, %v1047
        %v1054 = vadd.f32 %v988, 1.0
        %v1055 = vlog2.pop %v1054
        %v1056 = vmul.f32 %v1055, 0.6931472
        %v1057 = vmul.f32 -0.5, %v988
        %v1058 = vadd.f32 %v1057, 1.0
        %v1059 = vmul.f32 %v1058, %v988
        %v1060 = vand.u32 2147483647, %v988
        %vm1061 = vcmp.lt.f32.partialorder %v1060, 0.0004427343
        %v1062 = vsel %vm1061, %v1059, %v1056
        %v1063 = vadd.f32 %v990, 1.0
        %v1064 = vlog2.pop %v1063
        %v1065 = vmul.f32 %v1064, 0.6931472
        %v1066 = vmul.f32 -0.5, %v990
        %v1067 = vadd.f32 %v1066, 1.0
        %v1068 = vmul.f32 %v1067, %v990
        %v1069 = vand.u32 2147483647, %v990
        %vm1070 = vcmp.lt.f32.partialorder %v1069, 0.0004427343
        %v1071 = vsel %vm1070, %v1068, %v1065
        %v1072 = vadd.f32 %v992, 1.0
        %v1073 = vlog2.pop %v1072
        %v1074 = vmul.f32 %v1073, 0.6931472
        %v1075 = vmul.f32 -0.5, %v992
        %v1076 = vadd.f32 %v1075, 1.0
        %v1077 = vmul.f32 %v1076, %v992
        %v1078 = vand.u32 2147483647, %v992
        %vm1079 = vcmp.lt.f32.partialorder %v1078, 0.0004427343
        %v1080 = vsel %vm1079, %v1077, %v1074
        %v1081 = vadd.f32 %v994, 1.0
        %v1082 = vlog2.pop %v1081
        %v1083 = vmul.f32 %v1082, 0.6931472
        %v1084 = vmul.f32 -0.5, %v994
        %v1085 = vadd.f32 %v1084, 1.0
        %v1086 = vmul.f32 %v1085, %v994
        %v1087 = vand.u32 2147483647, %v994
        %vm1088 = vcmp.lt.f32.partialorder %v1087, 0.0004427343
        %v1089 = vsel %vm1088, %v1086, %v1083
        %v1090 = vadd.f32 %v996, 1.0
        %v1091 = vlog2.pop %v1090
        %v1092 = vmul.f32 %v1091, 0.6931472
        %v1093 = vmul.f32 -0.5, %v996
        %v1094 = vadd.f32 %v1093, 1.0
        %v1095 = vmul.f32 %v1094, %v996
        %v1096 = vand.u32 2147483647, %v996
        %vm1097 = vcmp.lt.f32.partialorder %v1096, 0.0004427343
        %v1098 = vsel %vm1097, %v1095, %v1092
        %v1099 = vadd.f32 %v998, 1.0
        %v1100 = vlog2.pop %v1099
        %v1101 = vmul.f32 %v1100, 0.6931472
        %v1102 = vmul.f32 -0.5, %v998
        %v1103 = vadd.f32 %v1102, 1.0
        %v1104 = vmul.f32 %v1103, %v998
        %v1105 = vand.u32 2147483647, %v998
        %vm1106 = vcmp.lt.f32.partialorder %v1105, 0.0004427343
        %v1107 = vsel %vm1106, %v1104, %v1101
        %v1108 = vadd.f32 %v1000, 1.0
        %v1109 = vlog2.pop %v1108
        %v1110 = vmul.f32 %v1109, 0.6931472
        %v1111 = vmul.f32 -0.5, %v1000
        %v1112 = vadd.f32 %v1111, 1.0
        %v1113 = vmul.f32 %v1112, %v1000
        %v1114 = vand.u32 2147483647, %v1000
        %vm1115 = vcmp.lt.f32.partialorder %v1114, 0.0004427343
        %v1116 = vsel %vm1115, %v1113, %v1110
        %v1117 = vadd.f32 %v1002, 1.0
        %v1118 = vlog2.pop %v1117
        %v1119 = vmul.f32 %v1118, 0.6931472
        %v1120 = vmul.f32 -0.5, %v1002
        %v1121 = vadd.f32 %v1120, 1.0
        %v1122 = vmul.f32 %v1121, %v1002
        %v1123 = vand.u32 2147483647, %v1002
        %vm1124 = vcmp.lt.f32.partialorder %v1123, 0.0004427343
        %v1125 = vsel %vm1124, %v1122, %v1119
        %v1126 = vadd.f32 %v1004, 1.0
        %v1127 = vlog2.pop %v1126
        %v1128 = vmul.f32 %v1127, 0.6931472
        %v1129 = vmul.f32 -0.5, %v1004
        %v1130 = vadd.f32 %v1129, 1.0
        %v1131 = vmul.f32 %v1130, %v1004
        %v1132 = vand.u32 2147483647, %v1004
        %vm1133 = vcmp.lt.f32.partialorder %v1132, 0.0004427343
        %v1134 = vsel %vm1133, %v1131, %v1128
        %v1135 = vadd.f32 %v1006, 1.0
        %v1136 = vlog2.pop %v1135
        %v1137 = vmul.f32 %v1136, 0.6931472
        %v1138 = vmul.f32 -0.5, %v1006
        %v1139 = vadd.f32 %v1138, 1.0
        %v1140 = vmul.f32 %v1139, %v1006
        %v1141 = vand.u32 2147483647, %v1006
        %vm1142 = vcmp.lt.f32.partialorder %v1141, 0.0004427343
        %v1143 = vsel %vm1142, %v1140, %v1137
        %v1144 = vadd.f32 %v1008, 1.0
        %v1145 = vlog2.pop %v1144
        %v1146 = vmul.f32 %v1145, 0.6931472
        %v1147 = vmul.f32 -0.5, %v1008
        %v1148 = vadd.f32 %v1147, 1.0
        %v1149 = vmul.f32 %v1148, %v1008
        %v1150 = vand.u32 2147483647, %v1008
        %vm1151 = vcmp.lt.f32.partialorder %v1150, 0.0004427343
        %v1152 = vsel %vm1151, %v1149, %v1146
        %v1153 = vadd.f32 %v897, %v1017
        %v1154 = vadd.f32 %v898, %v1026
        %v1155 = vadd.f32 %v899, %v1035
        %v1156 = vadd.f32 %v900, %v1044
        %v1157 = vadd.f32 %v901, %v1053
        %v1158 = vadd.f32 %v902, %v1062
        %v1159 = vadd.f32 %v903, %v1071
        %v1160 = vadd.f32 %v904, %v1080
        %v1161 = vadd.f32 %v905, %v1089
        %v1162 = vadd.f32 %v906, %v1098
        %v1163 = vadd.f32 %v907, %v1107
        %v1164 = vadd.f32 %v908, %v1116
        %v1165 = vadd.f32 %v909, %v1125
        %v1166 = vadd.f32 %v910, %v1134
        %v1167 = vadd.f32 %v911, %v1143
        %v1168 = vadd.f32 %v912, %v1152
        %v1169 = vsel %vm913, %v929, %v1153
        %v1170 = vsel %vm914, %v930, %v1154
        %v1171 = vsel %vm915, %v931, %v1155
        %v1172 = vsel %vm916, %v932, %v1156
        %v1173 = vsel %vm917, %v933, %v1157
        %v1174 = vsel %vm918, %v934, %v1158
        %v1175 = vsel %vm919, %v935, %v1159
        %v1176 = vsel %vm920, %v936, %v1160
        %v1177 = vsel %vm921, %v937, %v1161
        %v1178 = vsel %vm922, %v938, %v1162
        %v1179 = vsel %vm923, %v939, %v1163
        %v1180 = vsel %vm924, %v940, %v1164
        %v1181 = vsel %vm925, %v941, %v1165
        %v1182 = vsel %vm926, %v942, %v1166
        %v1183 = vsel %vm927, %v943, %v1167
        %v1184 = vsel %vm928, %v944, %v1168
        %vm1185 = vcmp.lt.s32.totalorder %v896, 64
        %v1186 = vsel %vm1185, %v833, %v1169
        %v1187 = vsel %vm1185, %v837, %v1170
        %v1188 = vsel %vm1185, %v841, %v1171
        %v1189 = vsel %vm1185, %v845, %v1172
        %v1190 = vsel %vm1185, %v849, %v1173
        %v1191 = vsel %vm1185, %v853, %v1174
        %v1192 = vsel %vm1185, %v857, %v1175
        %v1193 = vsel %vm1185, %v861, %v1176
        %v1194 = vsel %vm1185, %v865, %v1177
        %v1195 = vsel %vm1185, %v869, %v1178
        %v1196 = vsel %vm1185, %v873, %v1179
        %v1197 = vsel %vm1185, %v877, %v1180
        %v1198 = vsel %vm1185, %v881, %v1181
        %v1199 = vsel %vm1185, %v885, %v1182
        %v1200 = vsel %vm1185, %v889, %v1183
        %v1201 = vsel %vm1185, %v893, %v1184
        %1202 = vst [vmem:[%s164] sm:$0xff] %v1186
        %1203 = vst [vmem:[%s164 + $0x8] sm:$0xff] %v1187
        %1204 = vst [vmem:[%s164 + $0x10] sm:$0xff] %v1188
        %1205 = vst [vmem:[%s164 + $0x18] sm:$0xff] %v1189
        %1206 = vst [vmem:[%s164 + $0x20] sm:$0xff] %v1190
        %1207 = vst [vmem:[%s164 + $0x28] sm:$0xff] %v1191
        %1208 = vst [vmem:[%s164 + $0x30] sm:$0xff] %v1192
        %1209 = vst [vmem:[%s164 + $0x38] sm:$0xff] %v1193
        %1210 = vst [vmem:[%s164 + $0x40] sm:$0xff] %v1194
        %1211 = vst [vmem:[%s164 + $0x48] sm:$0xff] %v1195
        %1212 = vst [vmem:[%s164 + $0x50] sm:$0xff] %v1196
        %1213 = vst [vmem:[%s164 + $0x58] sm:$0xff] %v1197
        %1214 = vst [vmem:[%s164 + $0x60] sm:$0xff] %v1198
        %1215 = vst [vmem:[%s164 + $0x68] sm:$0xff] %v1199
        %1216 = vst [vmem:[%s164 + $0x70] sm:$0xff] %v1200
        %1217 = vst [vmem:[%s164 + $0x78] sm:$0xff] %v1201
        %s1218 = sand.u32 %s93, 1
        %s1219 = scalar_lea.sflag [#allocation3], %s1218
        %s1220 = sand.u32 %s93, 1
        %s1221 = smul.addr %s1220, 128
        %s1222 = scalar_lea.vmem [#allocation2], %s1221
        // Predicated region
        $region33: #{tpu_custom_call.1} parent=31 // pred_check
          %p1223 = pneg %p103
        $region34: #{tpu_custom_call.1} parent=31 // pred_check_branch
          %1225 = sbr.rel (%p1223) target = $region36
        $region35: #{tpu_custom_call.1} parent=31 // pred_region
          %s1226 = smul.u32 16, %s17
          %1228 = vsyncadd %s1219, 0
          %s1229 = smul.addr %s1226, 8
          %s1230 = scalar_lea.hbm %s3, %s1229
          %s1231 = sshll.u32 %s1222, 4
          %s1232 = int_to_ptr.vmem [resolvable:$true] %s1231
          %s1233 = sshll.u32 %s1230, 4
          %s1234 = int_to_ptr.hbm [resolvable:$true] %s1233
          %1239 = dma.vmem_to_hbm [thread:$0]  %s1232, 2048, %s1234, %s1219, 128, 128, 8
        $region36: #{tpu_custom_call.1} parent=31 // pred_fallthru
          _
      $region32: #{tpu_custom_call.1} parent=5 // pred_fallthru
        _
      %p1240 = scmp.le.s32.totalorder 2, %s12
      // Predicated region
      $region37: #{tpu_custom_call.1} parent=5 // pred_check
        %p1241 = pneg %p1240
      $region38: #{tpu_custom_call.1} parent=5 // pred_check_branch
        %1243 = sbr.rel (%p1241) target = $region40
      $region39: #{tpu_custom_call.1} parent=5 // pred_region
        %s1244 = ssub.s32 %s12, 2
        // Predicated region
        $region41: #{tpu_custom_call.1} parent=39 // pred_check
          %p1245 = pneg %p109
        $region42: #{tpu_custom_call.1} parent=39 // pred_check_branch
          %1247 = sbr.rel (%p1245) target = $region44
        $region43: #{tpu_custom_call.1} parent=39 // pred_region
          %s1248 = sand.u32 %s94, 1
          %s1249 = scalar_lea.sflag [#allocation3], %s1248
          %s1250 = sand.u32 %s94, 1
          %s1251 = smul.addr %s1250, 128
          %s1252 = scalar_lea.vmem [#allocation2], %s1251
          %1254 = dma.done %s1249, 2048
        $region44: #{tpu_custom_call.1} parent=39 // pred_fallthru
          _
      $region40: #{tpu_custom_call.1} parent=5 // pred_fallthru
        _
    $region6: #{tpu_custom_call.1} parent=1 // loop_footer
      %s16 = sadd.s32 1, %s12
    $region7: #{tpu_custom_call.1} parent=1 // loop_footer_branch
      %11 = sbr.rel target = $region3
    $region8: #{tpu_custom_call.1} parent=1 // loop_exit
      _
    %1255 = vsyncpa [#allocation3], 1
    %s1256 = scalar_lea.sflag [#allocation3], 1
    %1257 = vsyncpa %s1256, 1

</llo_original>
